<compile_context>
chip_gen: v5e
topology: v5e:2x2
jax: 0.10.0
libtpu: 0.0.40
codegen_flags: <defaults>
</compile_context>

<pallas_src>
import numpy as np

import jax
import jax.numpy as jnp
from jax.experimental import pallas as pl
from jax.experimental.pallas import tpu as pltpu


_NUM_CLASSES = 10
_OUT_LANES = 128          # lane-dense output slab; wrapper slices [:, :10]


# ---------------------------------------------------------------------------
# Host-side packing: fold conv taps / pooling / flatten into matmul operands
# ---------------------------------------------------------------------------

def _conv_banded_weight(w_oihw, width):
    """Torch conv weight (Cout, Cin, 3, 3) -> 3 per-tap banded matrices.

    B[kh, win*Cin + ci, wout*Cout + co] = w[co, ci, kh, win - wout + 1]
    so that with activations laid out as x[h, w*Cin + ci]:
        y[h, wout*Cout + co] = sum_kh  x_row[h + kh - 1] @ B[kh]
    Zero padding along W is implicit in the band structure; padding along H is
    handled by the in-kernel row shifts.
    """
    w = np.asarray(w_oihw, np.float32)
    cout, cin = w.shape[0], w.shape[1]
    B = np.zeros((3, width * cin, width * cout), np.float32)
    for kh in range(3):
        for kw in range(3):
            blk = w[:, :, kh, kw].T                       # (Cin, Cout)
            for wout in range(width):
                win = wout + kw - 1
                if 0 <= win < width:
                    B[kh, win * cin:(win + 1) * cin,
                          wout * cout:(wout + 1) * cout] = blk
    return B


def _pool_w_select(w, c):
    """0/1 lane selector: (y @ S[dw])[r, wo*C + c] = y[r, (2*wo+dw)*C + c]."""
    wo = w // 2
    S = np.zeros((2, w * c, wo * c), np.float32)
    for dw in range(2):
        for j in range(wo):
            for k in range(c):
                S[dw, (2 * j + dw) * c + k, j * c + k] = 1.0
    return S


def _fc1_blocks(wfc1, h, w, c):
    """Fold torch's NCHW flatten (k = ch*H*W + row*W + col) into fc1 weights.

    fc1_pre[n] = bias + sum_h  a3[n*4 + h, :] @ G[h]   with a3[., col*C + ch].
    """
    wf = np.asarray(wfc1, np.float32)                     # (64, C*H*W)
    out = wf.shape[0]
    G = np.zeros((h, w * c, out), np.float32)
    for row in range(h):
        for col in range(w):
            for ch in range(c):
                G[row, col * c + ch, :] = wf[:, ch * h * w + row * w + col]
    return G


_OPERAND_KEYS = ("bw1", "cb1", "sw1",
                 "bw2", "cb2", "sw2",
                 "bw3", "cb3",
                 "g1", "bf1", "w2t", "bf2")


def prepare_params(params):
    """Pack PyTorch-layout parameters into the kernel's matmul operands.

    Real-weight operands are stored as bf16 (single-pass MXU, half the VMEM /
    vld traffic; DEFAULT precision would truncate f32 to bf16 anyway); biases
    stay f32 and are added to the f32 accumulator.
    """
    w2t = np.zeros((64, _OUT_LANES), np.float32)          # lane-dense fc2
    w2t[:, :_NUM_CLASSES] = np.asarray(params["wfc2"], np.float32).T
    bf2 = np.zeros((1, _OUT_LANES), np.float32)
    bf2[0, :_NUM_CLASSES] = np.asarray(params["bfc2"], np.float32)

    ops_np = {
        # conv1 (16x16, 4 -> 8) + pool
        "bw1": _conv_banded_weight(params["w1"], 16),
        "cb1": np.tile(np.asarray(params["b1"], np.float32), 16)[None, :],
        "sw1": _pool_w_select(16, 8),
        # conv2 (8x8, 8 -> 16) + pool
        "bw2": _conv_banded_weight(params["w2"], 8),
        "cb2": np.tile(np.asarray(params["b2"], np.float32), 8)[None, :],
        "sw2": _pool_w_select(8, 16),
        # conv3 (4x4, 16 -> 32)
        "bw3": _conv_banded_weight(params["w3"], 4),
        "cb3": np.tile(np.asarray(params["b3"], np.float32), 4)[None, :],
        # fc layers (NCHW flatten folded into g1; fc2 padded to 128 lanes)
        "g1": _fc1_blocks(params["wfc1"], 4, 4, 32),
        "bf1": np.asarray(params["bfc1"], np.float32)[None, :],
        "w2t": w2t,
        "bf2": bf2,
    }
    bf16_keys = {"bw1", "sw1", "bw2", "sw2", "bw3", "g1", "w2t"}
    return {k: jnp.asarray(v, jnp.bfloat16 if k in bf16_keys else jnp.float32)
            for k, v in ops_np.items()}


# ---------------------------------------------------------------------------
# The fused Pallas kernel: whole forward, whole batch, everything VMEM-resident
# ---------------------------------------------------------------------------

def _convnet5_kernel(x_ref,
                     bw1, cb1, sw1,
                     bw2, cb2, sw2,
                     bw3, cb3,
                     g1, bf1, w2t, bf2,
                     out_ref,
                     shift_s, pool_s, a3_s):
    """Activations live as (N*H, W*C) f32: image n's row h is sublane n*H + h,
    channel c of column w is lane w*C + c.  Every matmul covers the whole batch.
    Only real weights and the 0/1 W-pool lane selectors touch the MXU (bf16
    operands, f32 accumulation); row shifts, the pool H-reduction and the
    NCHW-flatten grouping are exact scratch reads + VPU max/where."""
    total_rows = x_ref.shape[0]
    n_batch = total_rows // 16

    def mm(a, b):
        return jnp.dot(a.astype(jnp.bfloat16), b,
                       preferred_element_type=jnp.float32)

    # Rows [0:8) of the shift scratch stay zero forever: they provide the conv
    # H zero-padding for the first stacked row.
    shift_s[...] = jnp.zeros(shift_s.shape, shift_s.dtype)

    def conv_relu(x, bw_ref, cb_ref, h_img):
        # x: (N*h_img, W*Cin).  y[r] = x[r-1]@bw[0] + x[r]@bw[1] + x[r+1]@bw[2]
        # with rows that would cross an image boundary zeroed (H padding).
        rows = x.shape[0]
        shift_s[8:8 + rows, :] = x
        up = shift_s[7:7 + rows, :]            # up[r] = x[r-1]  (row 7 is zero)
        dn = shift_s[9:9 + rows, :]            # dn[r] = x[r+1]
        in_row = jax.lax.broadcasted_iota(jnp.int32, x.shape, 0) & (h_img - 1)
        up = jnp.where(in_row == 0, 0.0, up)
        dn = jnp.where(in_row == h_img - 1, 0.0, dn)
        # Three K<=128 taps: single MXU pass per dot on every TPU generation.
        y = mm(up, bw_ref[0]) + mm(x, bw_ref[1]) + mm(dn, bw_ref[2]) + cb_ref[...]
        return jnp.maximum(y, 0.0)

    def maxpool(y, sw_ref):
        # 2x2 / stride-2 max pool.  W direction: 0/1 lane selectors (exact in
        # bf16, one product per output lane).  H direction: elementwise max of
        # even/odd sublanes via stride-2 scratch reads (no MXU work).
        rows = y.shape[0]
        m = jnp.maximum(mm(y, sw_ref[0]), mm(y, sw_ref[1]))     # (rows, Wo*C)
        pool_s[0:rows, :] = m
        ev = pool_s[pl.ds(0, rows // 2, stride=2), :]
        od = pool_s[pl.ds(1, rows // 2, stride=2), :]
        return jnp.maximum(ev, od)

    x = x_ref[...]                                   # (N*16, 64) f32
    a = conv_relu(x, bw1, cb1, 16)                   # (N*16, 128)
    a = maxpool(a, sw1)                              # (N*8,  64)
    a = conv_relu(a, bw2, cb2, 8)                    # (N*8,  128)
    a = maxpool(a, sw2)                              # (N*4,  64)
    a = conv_relu(a, bw3, cb3, 4)                    # (N*4,  128)

    # fc1: torch's NCHW flatten is folded into g1; image n's rows are sublanes
    # n*4 + h, so each h-term is one stride-4 sublane read + one (N,128)@(128,64)
    # dot — 4 dots total regardless of N (one-hot row-select matmuls removed).
    a3_s[...] = a
    f = bf1[...]                                     # (1, 64) f32, broadcasts
    for h in range(4):                               # fixed, tiny unroll
        rows_h = a3_s[pl.ds(h, n_batch, stride=4), :]        # (N, 128)
        f = f + mm(rows_h, g1[h])
    f = jnp.maximum(f, 0.0)                          # (N, 64)

    # fc2 into a lane-dense 128-wide slab: one unmasked store.
    out_ref[...] = mm(f, w2t[...]) + bf2[...]        # (N, 128)


def convnet5_forward(x_nchw, operands):
    """x_nchw: (N, 4, 16, 16) float32 (PyTorch layout) -> class scores (N, 10)."""
    n = x_nchw.shape[0]
    # NCHW -> batch-stacked lane-dense (N*16, 64): row n*16+h, lane w*4+c.
    # TODO(synk): for large N accept NHWC upstream (or repack via in-kernel DMA)
    # to avoid this extra HBM round trip of the input.
    x_rows = jnp.transpose(x_nchw, (0, 2, 3, 1)).reshape(n * 16, 16 * 4)
    out = pl.pallas_call(
        _convnet5_kernel,
        out_shape=jax.ShapeDtypeStruct((n, _OUT_LANES), jnp.float32),
        scratch_shapes=[
            pltpu.VMEM((n * 16 + 16, 64), jnp.float32),   # conv row-shift buffer
            pltpu.VMEM((n * 16, 64), jnp.float32),        # pool H-reduction buffer
            pltpu.VMEM((n * 4, 128), jnp.float32),        # conv3 output for fc1
        ],
        # Grid-free: weights (~50 KiB) + activations (<100 KiB) are VMEM
        # resident.  For large N, add a batch grid axis over sublane-stacked
        # tiles with dimension_semantics=("parallel",) and size the tile for
        # v7x's 64 MiB VMEM.
        compiler_params=pltpu.CompilerParams(vmem_limit_bytes=16 * 1024 * 1024),
    )(x_rows, *[operands[k] for k in _OPERAND_KEYS])
    return out[:, :_NUM_CLASSES]


# ---------------------------------------------------------------------------
# Deterministic parameter init (PyTorch shapes) and pure-JAX reference
# ---------------------------------------------------------------------------

def init_params(key):
    ks = jax.random.split(key, 10)

    def w_init(k, shape, fan_in):
        return jax.random.normal(k, shape, jnp.float32) / jnp.sqrt(fan_in)

    return {
        "w1": w_init(ks[0], (8, 4, 3, 3), 4 * 9),
        "b1": w_init(ks[1], (8,), 4 * 9),
        "w2": w_init(ks[2], (16, 8, 3, 3), 8 * 9),
        "b2": w_init(ks[3], (16,), 8 * 9),
        "w3": w_init(ks[4], (32, 16, 3, 3), 16 * 9),
        "b3": w_init(ks[5], (32,), 16 * 9),
        "wfc1": w_init(ks[6], (64, 512), 512),
        "bfc1": w_init(ks[7], (64,), 512),
        "wfc2": w_init(ks[8], (10, 64), 64),
        "bfc2": w_init(ks[9], (10,), 64),
    }


def reference_forward(x, p):
    """Pure-JAX NCHW reference with the same numerics the TPU MXU applies at
    DEFAULT precision (bf16 multiplies, f32 accumulation), so the kernel can be
    validated tightly instead of hiding MXU truncation behind a loose atol."""
    bf = jnp.bfloat16

    def conv(h, w, b):
        y = jax.lax.conv_general_dilated(
            h.astype(bf), w.astype(bf), (1, 1), ((1, 1), (1, 1)),
            dimension_numbers=("NCHW", "OIHW", "NCHW"),
            preferred_element_type=jnp.float32)
        return jax.nn.relu(y + b.reshape(1, -1, 1, 1))

    def pool(h):
        return jax.lax.reduce_window(
            h, -jnp.inf, jax.lax.max, (1, 1, 2, 2), (1, 1, 2, 2), "VALID")

    def dense(h, w, b):
        return jnp.dot(h.astype(bf), w.T.astype(bf),
                       preferred_element_type=jnp.float32) + b

    h = pool(conv(x, p["w1"], p["b1"]))
    h = pool(conv(h, p["w2"], p["b2"]))
    h = conv(h, p["w3"], p["b3"])
    h = jax.nn.relu(dense(h.reshape(h.shape[0], -1), p["wfc1"], p["bfc1"]))
    return dense(h, p["wfc2"], p["bfc2"])


if __name__ == "__main__":
    key = jax.random.PRNGKey(0)
    kx, kp = jax.random.split(key)

    x = jax.random.normal(kx, (2, 4, 16, 16), jnp.float32)   # NCHW, like PyTorch
    params = init_params(kp)
    operands = prepare_params(params)        # one-time host-side weight packing

    fwd = jax.jit(convnet5_forward)
    scores = jax.block_until_ready(fwd(x, operands))
    assert scores.shape == (2, 10), scores.shape

    ref = jax.block_until_ready(reference_forward(x, params))
    max_err = float(jnp.max(jnp.abs(scores - ref)))
    # All data-movement ops in the kernel are now exact (roll-free shifts,
    # strided-slice pooling/flatten), so kernel and reference differ only by
    # f32 accumulation order of the shared bf16-multiply path.
    assert jnp.allclose(scores, ref, atol=2e-3, rtol=2e-3), (
        "mismatch vs reference", max_err)

    print("KERNEL_OK")
</pallas_src>

<mosaic_0001>
module attributes {stable_mosaic.version = 11 : i64} {
  func.func @_convnet5_kernel(%arg0: memref<32x64xf32, #tpu.memory_space<vmem>>, %arg1: memref<3x64x128xbf16, #tpu.memory_space<vmem>>, %arg2: memref<1x128xf32, #tpu.memory_space<vmem>>, %arg3: memref<2x128x64xbf16, #tpu.memory_space<vmem>>, %arg4: memref<3x64x128xbf16, #tpu.memory_space<vmem>>, %arg5: memref<1x128xf32, #tpu.memory_space<vmem>>, %arg6: memref<2x128x64xbf16, #tpu.memory_space<vmem>>, %arg7: memref<3x64x128xbf16, #tpu.memory_space<vmem>>, %arg8: memref<1x128xf32, #tpu.memory_space<vmem>>, %arg9: memref<4x128x64xbf16, #tpu.memory_space<vmem>>, %arg10: memref<1x64xf32, #tpu.memory_space<vmem>>, %arg11: memref<64x128xbf16, #tpu.memory_space<vmem>>, %arg12: memref<1x128xf32, #tpu.memory_space<vmem>>, %arg13: memref<2x128xf32, #tpu.memory_space<vmem>>, %arg14: memref<48x64xf32, #tpu.memory_space<vmem>>, %arg15: memref<32x64xf32, #tpu.memory_space<vmem>>, %arg16: memref<8x128xf32, #tpu.memory_space<vmem>>) attributes {dimension_semantics = [], scalar_prefetch = 0 : i64, scratch_operands = 3 : i64, tpu.core_type = #tpu.core_type<tc>} {
    %cst = arith.constant 0.000000e+00 : f32
    %0 = vector.broadcast %cst : f32 to vector<48x64xf32>
    %c0 = arith.constant 0 : index
    %c0_0 = arith.constant 0 : index
    %1 = vector.load %arg14[%c0, %c0_0] : memref<48x64xf32, #tpu.memory_space<vmem>>, vector<48x64xf32>
    tpu.vector_store %arg14[%c0, %c0_0], %0 {strides = array<i32>} : memref<48x64xf32, #tpu.memory_space<vmem>>, vector<48x64xf32>,
    %c0_1 = arith.constant 0 : index
    %c0_2 = arith.constant 0 : index
    %2 = vector.load %arg0[%c0_1, %c0_2] : memref<32x64xf32, #tpu.memory_space<vmem>>, vector<32x64xf32>
    %c8 = arith.constant 8 : index
    %c0_3 = arith.constant 0 : index
    %3 = vector.load %arg14[%c8, %c0_3] : memref<48x64xf32, #tpu.memory_space<vmem>>, vector<32x64xf32>
    tpu.vector_store %arg14[%c8, %c0_3], %2 {strides = array<i32>} : memref<48x64xf32, #tpu.memory_space<vmem>>, vector<32x64xf32>,
    %c7 = arith.constant 7 : index
    %c0_4 = arith.constant 0 : index
    %4 = vector.load %arg14[%c7, %c0_4] : memref<48x64xf32, #tpu.memory_space<vmem>>, vector<32x64xf32>
    %c9 = arith.constant 9 : index
    %c0_5 = arith.constant 0 : index
    %5 = vector.load %arg14[%c9, %c0_5] : memref<48x64xf32, #tpu.memory_space<vmem>>, vector<32x64xf32>
    %6 = tpu.iota {dimensions = array<i32: 0>} : vector<32x64xi32>
    %c15_i32 = arith.constant 15 : i32
    %7 = vector.broadcast %c15_i32 : i32 to vector<32x64xi32>
    %8 = arith.andi %6, %7 : vector<32x64xi32>
    %c0_i32 = arith.constant 0 : i32
    %9 = vector.broadcast %c0_i32 : i32 to vector<32x64xi32>
    %10 = arith.cmpi eq, %8, %9 : vector<32x64xi32>
    %cst_6 = arith.constant 0.000000e+00 : f32
    %11 = vector.broadcast %cst_6 : f32 to vector<32x64xf32>
    %12 = arith.select %10, %11, %4 : vector<32x64xi1>, vector<32x64xf32>
    %c15_i32_7 = arith.constant 15 : i32
    %13 = vector.broadcast %c15_i32_7 : i32 to vector<32x64xi32>
    %14 = arith.cmpi eq, %8, %13 : vector<32x64xi32>
    %cst_8 = arith.constant 0.000000e+00 : f32
    %15 = vector.broadcast %cst_8 : f32 to vector<32x64xf32>
    %16 = arith.select %14, %15, %5 : vector<32x64xi1>, vector<32x64xf32>
    %c0_9 = arith.constant 0 : index
    %c0_10 = arith.constant 0 : index
    %c0_11 = arith.constant 0 : index
    %17 = vector.load %arg1[%c0_9, %c0_10, %c0_11] : memref<3x64x128xbf16, #tpu.memory_space<vmem>>, vector<1x64x128xbf16>
    %18 = vector.shape_cast %17 : vector<1x64x128xbf16> to vector<64x128xbf16>
    %19 = arith.truncf %12 : vector<32x64xf32> to vector<32x64xbf16>
    %cst_12 = arith.constant dense<0.000000e+00> : vector<32x128xf32>
    %20 = tpu.matmul %19, %18, %cst_12 {dimension_numbers = #tpu.dot_dimension_numbers<[1], [0], [0], [1], [0, 0, 1, 1], [], []>} : vector<32x64xbf16>, vector<64x128xbf16>, vector<32x128xf32> -> vector<32x128xf32>
    %c1 = arith.constant 1 : index
    %c0_13 = arith.constant 0 : index
    %c0_14 = arith.constant 0 : index
    %21 = vector.load %arg1[%c1, %c0_13, %c0_14] : memref<3x64x128xbf16, #tpu.memory_space<vmem>>, vector<1x64x128xbf16>
    %22 = vector.shape_cast %21 : vector<1x64x128xbf16> to vector<64x128xbf16>
    %23 = arith.truncf %2 : vector<32x64xf32> to vector<32x64xbf16>
    %cst_15 = arith.constant dense<0.000000e+00> : vector<32x128xf32>
    %24 = tpu.matmul %23, %22, %cst_15 {dimension_numbers = #tpu.dot_dimension_numbers<[1], [0], [0], [1], [0, 0, 1, 1], [], []>} : vector<32x64xbf16>, vector<64x128xbf16>, vector<32x128xf32> -> vector<32x128xf32>
    %25 = arith.addf %20, %24 : vector<32x128xf32>
    %c2 = arith.constant 2 : index
    %c0_16 = arith.constant 0 : index
    %c0_17 = arith.constant 0 : index
    %26 = vector.load %arg1[%c2, %c0_16, %c0_17] : memref<3x64x128xbf16, #tpu.memory_space<vmem>>, vector<1x64x128xbf16>
    %27 = vector.shape_cast %26 : vector<1x64x128xbf16> to vector<64x128xbf16>
    %28 = arith.truncf %16 : vector<32x64xf32> to vector<32x64xbf16>
    %cst_18 = arith.constant dense<0.000000e+00> : vector<32x128xf32>
    %29 = tpu.matmul %28, %27, %cst_18 {dimension_numbers = #tpu.dot_dimension_numbers<[1], [0], [0], [1], [0, 0, 1, 1], [], []>} : vector<32x64xbf16>, vector<64x128xbf16>, vector<32x128xf32> -> vector<32x128xf32>
    %30 = arith.addf %25, %29 : vector<32x128xf32>
    %c0_19 = arith.constant 0 : index
    %c0_20 = arith.constant 0 : index
    %31 = vector.load %arg2[%c0_19, %c0_20] : memref<1x128xf32, #tpu.memory_space<vmem>>, vector<1x128xf32>
    %32 = vector.broadcast %31 : vector<1x128xf32> to vector<32x128xf32>
    %33 = arith.addf %30, %32 : vector<32x128xf32>
    %cst_21 = arith.constant 0.000000e+00 : f32
    %34 = vector.broadcast %cst_21 : f32 to vector<32x128xf32>
    %35 = arith.maximumf %33, %34 : vector<32x128xf32>
    %c0_22 = arith.constant 0 : index
    %c0_23 = arith.constant 0 : index
    %c0_24 = arith.constant 0 : index
    %36 = vector.load %arg3[%c0_22, %c0_23, %c0_24] : memref<2x128x64xbf16, #tpu.memory_space<vmem>>, vector<1x128x64xbf16>
    %37 = vector.shape_cast %36 : vector<1x128x64xbf16> to vector<128x64xbf16>
    %38 = arith.truncf %35 : vector<32x128xf32> to vector<32x128xbf16>
    %cst_25 = arith.constant dense<0.000000e+00> : vector<32x64xf32>
    %39 = tpu.matmul %38, %37, %cst_25 {dimension_numbers = #tpu.dot_dimension_numbers<[1], [0], [0], [1], [0, 0, 1, 1], [], []>} : vector<32x128xbf16>, vector<128x64xbf16>, vector<32x64xf32> -> vector<32x64xf32>
    %c1_26 = arith.constant 1 : index
    %c0_27 = arith.constant 0 : index
    %c0_28 = arith.constant 0 : index
    %40 = vector.load %arg3[%c1_26, %c0_27, %c0_28] : memref<2x128x64xbf16, #tpu.memory_space<vmem>>, vector<1x128x64xbf16>
    %41 = vector.shape_cast %40 : vector<1x128x64xbf16> to vector<128x64xbf16>
    %42 = arith.truncf %35 : vector<32x128xf32> to vector<32x128xbf16>
    %cst_29 = arith.constant dense<0.000000e+00> : vector<32x64xf32>
    %43 = tpu.matmul %42, %41, %cst_29 {dimension_numbers = #tpu.dot_dimension_numbers<[1], [0], [0], [1], [0, 0, 1, 1], [], []>} : vector<32x128xbf16>, vector<128x64xbf16>, vector<32x64xf32> -> vector<32x64xf32>
    %44 = arith.maximumf %39, %43 : vector<32x64xf32>
    %c0_30 = arith.constant 0 : index
    %c0_31 = arith.constant 0 : index
    %45 = vector.load %arg15[%c0_30, %c0_31] : memref<32x64xf32, #tpu.memory_space<vmem>>, vector<32x64xf32>
    tpu.vector_store %arg15[%c0_30, %c0_31], %44 {strides = array<i32>} : memref<32x64xf32, #tpu.memory_space<vmem>>, vector<32x64xf32>,
    %c0_32 = arith.constant 0 : index
    %c0_33 = arith.constant 0 : index
    %46 = tpu.strided_load %arg15[%c0_32, %c0_33] {strides = array<i32: 2, 1>} : memref<32x64xf32, #tpu.memory_space<vmem>>, vector<16x64xf32>
    %c1_34 = arith.constant 1 : index
    %c0_35 = arith.constant 0 : index
    %47 = tpu.strided_load %arg15[%c1_34, %c0_35] {strides = array<i32: 2, 1>} : memref<32x64xf32, #tpu.memory_space<vmem>>, vector<16x64xf32>
    %48 = arith.maximumf %46, %47 : vector<16x64xf32>
    %c8_36 = arith.constant 8 : index
    %c0_37 = arith.constant 0 : index
    %49 = vector.load %arg14[%c8_36, %c0_37] : memref<48x64xf32, #tpu.memory_space<vmem>>, vector<16x64xf32>
    tpu.vector_store %arg14[%c8_36, %c0_37], %48 {strides = array<i32>} : memref<48x64xf32, #tpu.memory_space<vmem>>, vector<16x64xf32>,
    %c7_38 = arith.constant 7 : index
    %c0_39 = arith.constant 0 : index
    %50 = vector.load %arg14[%c7_38, %c0_39] : memref<48x64xf32, #tpu.memory_space<vmem>>, vector<16x64xf32>
    %c9_40 = arith.constant 9 : index
    %c0_41 = arith.constant 0 : index
    %51 = vector.load %arg14[%c9_40, %c0_41] : memref<48x64xf32, #tpu.memory_space<vmem>>, vector<16x64xf32>
    %52 = tpu.iota {dimensions = array<i32: 0>} : vector<16x64xi32>
    %c7_i32 = arith.constant 7 : i32
    %53 = vector.broadcast %c7_i32 : i32 to vector<16x64xi32>
    %54 = arith.andi %52, %53 : vector<16x64xi32>
    %c0_i32_42 = arith.constant 0 : i32
    %55 = vector.broadcast %c0_i32_42 : i32 to vector<16x64xi32>
    %56 = arith.cmpi eq, %54, %55 : vector<16x64xi32>
    %cst_43 = arith.constant 0.000000e+00 : f32
    %57 = vector.broadcast %cst_43 : f32 to vector<16x64xf32>
    %58 = arith.select %56, %57, %50 : vector<16x64xi1>, vector<16x64xf32>
    %c7_i32_44 = arith.constant 7 : i32
    %59 = vector.broadcast %c7_i32_44 : i32 to vector<16x64xi32>
    %60 = arith.cmpi eq, %54, %59 : vector<16x64xi32>
    %cst_45 = arith.constant 0.000000e+00 : f32
    %61 = vector.broadcast %cst_45 : f32 to vector<16x64xf32>
    %62 = arith.select %60, %61, %51 : vector<16x64xi1>, vector<16x64xf32>
    %c0_46 = arith.constant 0 : index
    %c0_47 = arith.constant 0 : index
    %c0_48 = arith.constant 0 : index
    %63 = vector.load %arg4[%c0_46, %c0_47, %c0_48] : memref<3x64x128xbf16, #tpu.memory_space<vmem>>, vector<1x64x128xbf16>
    %64 = vector.shape_cast %63 : vector<1x64x128xbf16> to vector<64x128xbf16>
    %65 = arith.truncf %58 : vector<16x64xf32> to vector<16x64xbf16>
    %cst_49 = arith.constant dense<0.000000e+00> : vector<16x128xf32>
    %66 = tpu.matmul %65, %64, %cst_49 {dimension_numbers = #tpu.dot_dimension_numbers<[1], [0], [0], [1], [0, 0, 1, 1], [], []>} : vector<16x64xbf16>, vector<64x128xbf16>, vector<16x128xf32> -> vector<16x128xf32>
    %c1_50 = arith.constant 1 : index
    %c0_51 = arith.constant 0 : index
    %c0_52 = arith.constant 0 : index
    %67 = vector.load %arg4[%c1_50, %c0_51, %c0_52] : memref<3x64x128xbf16, #tpu.memory_space<vmem>>, vector<1x64x128xbf16>
    %68 = vector.shape_cast %67 : vector<1x64x128xbf16> to vector<64x128xbf16>
    %69 = arith.truncf %48 : vector<16x64xf32> to vector<16x64xbf16>
    %cst_53 = arith.constant dense<0.000000e+00> : vector<16x128xf32>
    %70 = tpu.matmul %69, %68, %cst_53 {dimension_numbers = #tpu.dot_dimension_numbers<[1], [0], [0], [1], [0, 0, 1, 1], [], []>} : vector<16x64xbf16>, vector<64x128xbf16>, vector<16x128xf32> -> vector<16x128xf32>
    %71 = arith.addf %66, %70 : vector<16x128xf32>
    %c2_54 = arith.constant 2 : index
    %c0_55 = arith.constant 0 : index
    %c0_56 = arith.constant 0 : index
    %72 = vector.load %arg4[%c2_54, %c0_55, %c0_56] : memref<3x64x128xbf16, #tpu.memory_space<vmem>>, vector<1x64x128xbf16>
    %73 = vector.shape_cast %72 : vector<1x64x128xbf16> to vector<64x128xbf16>
    %74 = arith.truncf %62 : vector<16x64xf32> to vector<16x64xbf16>
    %cst_57 = arith.constant dense<0.000000e+00> : vector<16x128xf32>
    %75 = tpu.matmul %74, %73, %cst_57 {dimension_numbers = #tpu.dot_dimension_numbers<[1], [0], [0], [1], [0, 0, 1, 1], [], []>} : vector<16x64xbf16>, vector<64x128xbf16>, vector<16x128xf32> -> vector<16x128xf32>
    %76 = arith.addf %71, %75 : vector<16x128xf32>
    %c0_58 = arith.constant 0 : index
    %c0_59 = arith.constant 0 : index
    %77 = vector.load %arg5[%c0_58, %c0_59] : memref<1x128xf32, #tpu.memory_space<vmem>>, vector<1x128xf32>
    %78 = vector.broadcast %77 : vector<1x128xf32> to vector<16x128xf32>
    %79 = arith.addf %76, %78 : vector<16x128xf32>
    %cst_60 = arith.constant 0.000000e+00 : f32
    %80 = vector.broadcast %cst_60 : f32 to vector<16x128xf32>
    %81 = arith.maximumf %79, %80 : vector<16x128xf32>
    %c0_61 = arith.constant 0 : index
    %c0_62 = arith.constant 0 : index
    %c0_63 = arith.constant 0 : index
    %82 = vector.load %arg6[%c0_61, %c0_62, %c0_63] : memref<2x128x64xbf16, #tpu.memory_space<vmem>>, vector<1x128x64xbf16>
    %83 = vector.shape_cast %82 : vector<1x128x64xbf16> to vector<128x64xbf16>
    %84 = arith.truncf %81 : vector<16x128xf32> to vector<16x128xbf16>
    %cst_64 = arith.constant dense<0.000000e+00> : vector<16x64xf32>
    %85 = tpu.matmul %84, %83, %cst_64 {dimension_numbers = #tpu.dot_dimension_numbers<[1], [0], [0], [1], [0, 0, 1, 1], [], []>} : vector<16x128xbf16>, vector<128x64xbf16>, vector<16x64xf32> -> vector<16x64xf32>
    %c1_65 = arith.constant 1 : index
    %c0_66 = arith.constant 0 : index
    %c0_67 = arith.constant 0 : index
    %86 = vector.load %arg6[%c1_65, %c0_66, %c0_67] : memref<2x128x64xbf16, #tpu.memory_space<vmem>>, vector<1x128x64xbf16>
    %87 = vector.shape_cast %86 : vector<1x128x64xbf16> to vector<128x64xbf16>
    %88 = arith.truncf %81 : vector<16x128xf32> to vector<16x128xbf16>
    %cst_68 = arith.constant dense<0.000000e+00> : vector<16x64xf32>
    %89 = tpu.matmul %88, %87, %cst_68 {dimension_numbers = #tpu.dot_dimension_numbers<[1], [0], [0], [1], [0, 0, 1, 1], [], []>} : vector<16x128xbf16>, vector<128x64xbf16>, vector<16x64xf32> -> vector<16x64xf32>
    %90 = arith.maximumf %85, %89 : vector<16x64xf32>
    %c0_69 = arith.constant 0 : index
    %c0_70 = arith.constant 0 : index
    %91 = vector.load %arg15[%c0_69, %c0_70] : memref<32x64xf32, #tpu.memory_space<vmem>>, vector<16x64xf32>
    tpu.vector_store %arg15[%c0_69, %c0_70], %90 {strides = array<i32>} : memref<32x64xf32, #tpu.memory_space<vmem>>, vector<16x64xf32>,
    %c0_71 = arith.constant 0 : index
    %c0_72 = arith.constant 0 : index
    %92 = tpu.strided_load %arg15[%c0_71, %c0_72] {strides = array<i32: 2, 1>} : memref<32x64xf32, #tpu.memory_space<vmem>>, vector<8x64xf32>
    %c1_73 = arith.constant 1 : index
    %c0_74 = arith.constant 0 : index
    %93 = tpu.strided_load %arg15[%c1_73, %c0_74] {strides = array<i32: 2, 1>} : memref<32x64xf32, #tpu.memory_space<vmem>>, vector<8x64xf32>
    %94 = arith.maximumf %92, %93 : vector<8x64xf32>
    %c8_75 = arith.constant 8 : index
    %c0_76 = arith.constant 0 : index
    %95 = vector.load %arg14[%c8_75, %c0_76] : memref<48x64xf32, #tpu.memory_space<vmem>>, vector<8x64xf32>
    tpu.vector_store %arg14[%c8_75, %c0_76], %94 {strides = array<i32>} : memref<48x64xf32, #tpu.memory_space<vmem>>, vector<8x64xf32>,
    %c7_77 = arith.constant 7 : index
    %c0_78 = arith.constant 0 : index
    %96 = vector.load %arg14[%c7_77, %c0_78] : memref<48x64xf32, #tpu.memory_space<vmem>>, vector<8x64xf32>
    %c9_79 = arith.constant 9 : index
    %c0_80 = arith.constant 0 : index
    %97 = vector.load %arg14[%c9_79, %c0_80] : memref<48x64xf32, #tpu.memory_space<vmem>>, vector<8x64xf32>
    %98 = tpu.iota {dimensions = array<i32: 0>} : vector<8x64xi32>
    %c3_i32 = arith.constant 3 : i32
    %99 = vector.broadcast %c3_i32 : i32 to vector<8x64xi32>
    %100 = arith.andi %98, %99 : vector<8x64xi32>
    %c0_i32_81 = arith.constant 0 : i32
    %101 = vector.broadcast %c0_i32_81 : i32 to vector<8x64xi32>
    %102 = arith.cmpi eq, %100, %101 : vector<8x64xi32>
    %cst_82 = arith.constant 0.000000e+00 : f32
    %103 = vector.broadcast %cst_82 : f32 to vector<8x64xf32>
    %104 = arith.select %102, %103, %96 : vector<8x64xi1>, vector<8x64xf32>
    %c3_i32_83 = arith.constant 3 : i32
    %105 = vector.broadcast %c3_i32_83 : i32 to vector<8x64xi32>
    %106 = arith.cmpi eq, %100, %105 : vector<8x64xi32>
    %cst_84 = arith.constant 0.000000e+00 : f32
    %107 = vector.broadcast %cst_84 : f32 to vector<8x64xf32>
    %108 = arith.select %106, %107, %97 : vector<8x64xi1>, vector<8x64xf32>
    %c0_85 = arith.constant 0 : index
    %c0_86 = arith.constant 0 : index
    %c0_87 = arith.constant 0 : index
    %109 = vector.load %arg7[%c0_85, %c0_86, %c0_87] : memref<3x64x128xbf16, #tpu.memory_space<vmem>>, vector<1x64x128xbf16>
    %110 = vector.shape_cast %109 : vector<1x64x128xbf16> to vector<64x128xbf16>
    %111 = arith.truncf %104 : vector<8x64xf32> to vector<8x64xbf16>
    %cst_88 = arith.constant dense<0.000000e+00> : vector<8x128xf32>
    %112 = tpu.matmul %111, %110, %cst_88 {dimension_numbers = #tpu.dot_dimension_numbers<[1], [0], [0], [1], [0, 0, 1, 1], [], []>} : vector<8x64xbf16>, vector<64x128xbf16>, vector<8x128xf32> -> vector<8x128xf32>
    %c1_89 = arith.constant 1 : index
    %c0_90 = arith.constant 0 : index
    %c0_91 = arith.constant 0 : index
    %113 = vector.load %arg7[%c1_89, %c0_90, %c0_91] : memref<3x64x128xbf16, #tpu.memory_space<vmem>>, vector<1x64x128xbf16>
    %114 = vector.shape_cast %113 : vector<1x64x128xbf16> to vector<64x128xbf16>
    %115 = arith.truncf %94 : vector<8x64xf32> to vector<8x64xbf16>
    %cst_92 = arith.constant dense<0.000000e+00> : vector<8x128xf32>
    %116 = tpu.matmul %115, %114, %cst_92 {dimension_numbers = #tpu.dot_dimension_numbers<[1], [0], [0], [1], [0, 0, 1, 1], [], []>} : vector<8x64xbf16>, vector<64x128xbf16>, vector<8x128xf32> -> vector<8x128xf32>
    %117 = arith.addf %112, %116 : vector<8x128xf32>
    %c2_93 = arith.constant 2 : index
    %c0_94 = arith.constant 0 : index
    %c0_95 = arith.constant 0 : index
    %118 = vector.load %arg7[%c2_93, %c0_94, %c0_95] : memref<3x64x128xbf16, #tpu.memory_space<vmem>>, vector<1x64x128xbf16>
    %119 = vector.shape_cast %118 : vector<1x64x128xbf16> to vector<64x128xbf16>
    %120 = arith.truncf %108 : vector<8x64xf32> to vector<8x64xbf16>
    %cst_96 = arith.constant dense<0.000000e+00> : vector<8x128xf32>
    %121 = tpu.matmul %120, %119, %cst_96 {dimension_numbers = #tpu.dot_dimension_numbers<[1], [0], [0], [1], [0, 0, 1, 1], [], []>} : vector<8x64xbf16>, vector<64x128xbf16>, vector<8x128xf32> -> vector<8x128xf32>
    %122 = arith.addf %117, %121 : vector<8x128xf32>
    %c0_97 = arith.constant 0 : index
    %c0_98 = arith.constant 0 : index
    %123 = vector.load %arg8[%c0_97, %c0_98] : memref<1x128xf32, #tpu.memory_space<vmem>>, vector<1x128xf32>
    %124 = vector.broadcast %123 : vector<1x128xf32> to vector<8x128xf32>
    %125 = arith.addf %122, %124 : vector<8x128xf32>
    %cst_99 = arith.constant 0.000000e+00 : f32
    %126 = vector.broadcast %cst_99 : f32 to vector<8x128xf32>
    %127 = arith.maximumf %125, %126 : vector<8x128xf32>
    %c0_100 = arith.constant 0 : index
    %c0_101 = arith.constant 0 : index
    %128 = vector.load %arg16[%c0_100, %c0_101] : memref<8x128xf32, #tpu.memory_space<vmem>>, vector<8x128xf32>
    tpu.vector_store %arg16[%c0_100, %c0_101], %127 {strides = array<i32>} : memref<8x128xf32, #tpu.memory_space<vmem>>, vector<8x128xf32>,
    %c0_102 = arith.constant 0 : index
    %c0_103 = arith.constant 0 : index
    %129 = vector.load %arg10[%c0_102, %c0_103] : memref<1x64xf32, #tpu.memory_space<vmem>>, vector<1x64xf32>
    %c0_104 = arith.constant 0 : index
    %c0_105 = arith.constant 0 : index
    %130 = tpu.strided_load %arg16[%c0_104, %c0_105] {strides = array<i32: 4, 1>} : memref<8x128xf32, #tpu.memory_space<vmem>>, vector<2x128xf32>
    %c0_106 = arith.constant 0 : index
    %c0_107 = arith.constant 0 : index
    %c0_108 = arith.constant 0 : index
    %131 = vector.load %arg9[%c0_106, %c0_107, %c0_108] : memref<4x128x64xbf16, #tpu.memory_space<vmem>>, vector<1x128x64xbf16>
    %132 = vector.shape_cast %131 : vector<1x128x64xbf16> to vector<128x64xbf16>
    %133 = arith.truncf %130 : vector<2x128xf32> to vector<2x128xbf16>
    %cst_109 = arith.constant dense<0.000000e+00> : vector<2x64xf32>
    %134 = tpu.matmul %133, %132, %cst_109 {dimension_numbers = #tpu.dot_dimension_numbers<[1], [0], [0], [1], [0, 0, 1, 1], [], []>} : vector<2x128xbf16>, vector<128x64xbf16>, vector<2x64xf32> -> vector<2x64xf32>
    %135 = vector.broadcast %129 : vector<1x64xf32> to vector<2x64xf32>
    %136 = arith.addf %135, %134 : vector<2x64xf32>
    %c1_110 = arith.constant 1 : index
    %c0_111 = arith.constant 0 : index
    %137 = tpu.strided_load %arg16[%c1_110, %c0_111] {strides = array<i32: 4, 1>} : memref<8x128xf32, #tpu.memory_space<vmem>>, vector<2x128xf32>
    %c1_112 = arith.constant 1 : index
    %c0_113 = arith.constant 0 : index
    %c0_114 = arith.constant 0 : index
    %138 = vector.load %arg9[%c1_112, %c0_113, %c0_114] : memref<4x128x64xbf16, #tpu.memory_space<vmem>>, vector<1x128x64xbf16>
    %139 = vector.shape_cast %138 : vector<1x128x64xbf16> to vector<128x64xbf16>
    %140 = arith.truncf %137 : vector<2x128xf32> to vector<2x128xbf16>
    %cst_115 = arith.constant dense<0.000000e+00> : vector<2x64xf32>
    %141 = tpu.matmul %140, %139, %cst_115 {dimension_numbers = #tpu.dot_dimension_numbers<[1], [0], [0], [1], [0, 0, 1, 1], [], []>} : vector<2x128xbf16>, vector<128x64xbf16>, vector<2x64xf32> -> vector<2x64xf32>
    %142 = arith.addf %136, %141 : vector<2x64xf32>
    %c2_116 = arith.constant 2 : index
    %c0_117 = arith.constant 0 : index
    %143 = tpu.strided_load %arg16[%c2_116, %c0_117] {strides = array<i32: 4, 1>} : memref<8x128xf32, #tpu.memory_space<vmem>>, vector<2x128xf32>
    %c2_118 = arith.constant 2 : index
    %c0_119 = arith.constant 0 : index
    %c0_120 = arith.constant 0 : index
    %144 = vector.load %arg9[%c2_118, %c0_119, %c0_120] : memref<4x128x64xbf16, #tpu.memory_space<vmem>>, vector<1x128x64xbf16>
    %145 = vector.shape_cast %144 : vector<1x128x64xbf16> to vector<128x64xbf16>
    %146 = arith.truncf %143 : vector<2x128xf32> to vector<2x128xbf16>
    %cst_121 = arith.constant dense<0.000000e+00> : vector<2x64xf32>
    %147 = tpu.matmul %146, %145, %cst_121 {dimension_numbers = #tpu.dot_dimension_numbers<[1], [0], [0], [1], [0, 0, 1, 1], [], []>} : vector<2x128xbf16>, vector<128x64xbf16>, vector<2x64xf32> -> vector<2x64xf32>
    %148 = arith.addf %142, %147 : vector<2x64xf32>
    %c3 = arith.constant 3 : index
    %c0_122 = arith.constant 0 : index
    %149 = tpu.strided_load %arg16[%c3, %c0_122] {strides = array<i32: 4, 1>} : memref<8x128xf32, #tpu.memory_space<vmem>>, vector<2x128xf32>
    %c3_123 = arith.constant 3 : index
    %c0_124 = arith.constant 0 : index
    %c0_125 = arith.constant 0 : index
    %150 = vector.load %arg9[%c3_123, %c0_124, %c0_125] : memref<4x128x64xbf16, #tpu.memory_space<vmem>>, vector<1x128x64xbf16>
    %151 = vector.shape_cast %150 : vector<1x128x64xbf16> to vector<128x64xbf16>
    %152 = arith.truncf %149 : vector<2x128xf32> to vector<2x128xbf16>
    %cst_126 = arith.constant dense<0.000000e+00> : vector<2x64xf32>
    %153 = tpu.matmul %152, %151, %cst_126 {dimension_numbers = #tpu.dot_dimension_numbers<[1], [0], [0], [1], [0, 0, 1, 1], [], []>} : vector<2x128xbf16>, vector<128x64xbf16>, vector<2x64xf32> -> vector<2x64xf32>
    %154 = arith.addf %148, %153 : vector<2x64xf32>
    %cst_127 = arith.constant 0.000000e+00 : f32
    %155 = vector.broadcast %cst_127 : f32 to vector<2x64xf32>
    %156 = arith.maximumf %154, %155 : vector<2x64xf32>
    %c0_128 = arith.constant 0 : index
    %c0_129 = arith.constant 0 : index
    %157 = vector.load %arg11[%c0_128, %c0_129] : memref<64x128xbf16, #tpu.memory_space<vmem>>, vector<64x128xbf16>
    %158 = arith.truncf %156 : vector<2x64xf32> to vector<2x64xbf16>
    %cst_130 = arith.constant dense<0.000000e+00> : vector<2x128xf32>
    %159 = tpu.matmul %158, %157, %cst_130 {dimension_numbers = #tpu.dot_dimension_numbers<[1], [0], [0], [1], [0, 0, 1, 1], [], []>} : vector<2x64xbf16>, vector<64x128xbf16>, vector<2x128xf32> -> vector<2x128xf32>
    %c0_131 = arith.constant 0 : index
    %c0_132 = arith.constant 0 : index
    %160 = vector.load %arg12[%c0_131, %c0_132] : memref<1x128xf32, #tpu.memory_space<vmem>>, vector<1x128xf32>
    %161 = vector.broadcast %160 : vector<1x128xf32> to vector<2x128xf32>
    %162 = arith.addf %159, %161 : vector<2x128xf32>
    %c0_133 = arith.constant 0 : index
    %c0_134 = arith.constant 0 : index
    %163 = vector.load %arg13[%c0_133, %c0_134] : memref<2x128xf32, #tpu.memory_space<vmem>>, vector<2x128xf32>
    tpu.vector_store %arg13[%c0_133, %c0_134], %162 {strides = array<i32>} : memref<2x128xf32, #tpu.memory_space<vmem>>, vector<2x128xf32>,
    return
  }
}

</mosaic_0001>

<llo_original>
// kernel: convnet5_forward.1
$region0: #{convnet5_forward.1}
  #allocation0 [shape = 'u32[]', space=smem, size = 0x4, offset = 0x4, fixed_abs, tag = 'smem constant byte address 0x4 - core index']
  #allocation1 [shape = 'u32[72,128]{1,0:T(1,128)}', space=vmem, size = 0x9000, scoped, tag = 'internal scratch']
  #allocation2 [shape = 'f32[48,64]{1,0:T(8,128)}', space=vmem, size = 0x6000, scoped, tag = 'scratch operand']
  #allocation3 [shape = 'f32[32,64]{1,0:T(8,128)}', space=vmem, size = 0x4000, scoped, tag = 'scratch operand']
  #allocation4 [shape = 'f32[8,128]{1,0:T(8,128)}', space=vmem, size = 0x1000, scoped, tag = 'scratch operand']
  %s0 = inlined_call_operand.vmem [shape: f32[32,64], index: 0, kind: input, shape index: {}]
  %s1 = inlined_call_operand.vmem [shape: bf16[3,64,128], index: 1, kind: input, shape index: {}]
  %s2 = inlined_call_operand.vmem [shape: f32[1,128], index: 2, kind: input, shape index: {}]
  %s3 = inlined_call_operand.vmem [shape: bf16[2,128,64], index: 3, kind: input, shape index: {}]
  %s4 = inlined_call_operand.vmem [shape: bf16[3,64,128], index: 4, kind: input, shape index: {}]
  %s5 = inlined_call_operand.vmem [shape: f32[1,128], index: 5, kind: input, shape index: {}]
  %s6 = inlined_call_operand.vmem [shape: bf16[2,128,64], index: 6, kind: input, shape index: {}]
  %s7 = inlined_call_operand.vmem [shape: bf16[3,64,128], index: 7, kind: input, shape index: {}]
  %s8 = inlined_call_operand.vmem [shape: f32[1,128], index: 8, kind: input, shape index: {}]
  %s9 = inlined_call_operand.vmem [shape: bf16[4,128,64], index: 9, kind: input, shape index: {}]
  %s10 = inlined_call_operand.vmem [shape: f32[1,64], index: 10, kind: input, shape index: {}]
  %s11 = inlined_call_operand.vmem [shape: bf16[64,128], index: 11, kind: input, shape index: {}]
  %s12 = inlined_call_operand.vmem [shape: f32[1,128], index: 12, kind: input, shape index: {}]
  %s13 = inlined_call_operand.hbm [shape: f32[2,128], index: 13, kind: output, shape index: {}]
  %s14 = sld [smem:[#allocation0]]
  $region62: #{convnet5_forward.1} parent=0
    _
  %s16 = ssub.s32 1, %s14
  %s17 = scalar_select 0, %s16, %s14
  $region1: #{convnet5_forward.1} parent=0
    #allocation5 [shape = 'u8[1024]{0}', space=vmem, size = 0x400, scoped, tag = 'output window, operand 0, single buffered']
    #allocation6 [shape = 's32[1]{0}', space=sflag, size = 0x4, scoped, tag = 'scoped memory for convnet5_forward.1']
    %18 = vsyncpa [#allocation6], 0
    // Predicated region
    $region2: #{convnet5_forward.1} parent=1 // pred_check
      _
    $region3: #{convnet5_forward.1} parent=1 // pred_check_branch
      %20 = sbr.rel (0) target = $region5
    $region4: #{convnet5_forward.1} parent=1 // pred_region
      _
    $region5: #{convnet5_forward.1} parent=1 // pred_fallthru
      _
    // Predicated region
    $region6: #{convnet5_forward.1} parent=1 // pred_check
      _
    $region7: #{convnet5_forward.1} parent=1 // pred_check_branch
      %22 = sbr.rel (0) target = $region9
    $region8: #{convnet5_forward.1} parent=1 // pred_region
      _
    $region9: #{convnet5_forward.1} parent=1 // pred_fallthru
      _
    // Predicated region
    $region10: #{convnet5_forward.1} parent=1 // pred_check
      _
    $region11: #{convnet5_forward.1} parent=1 // pred_check_branch
      %24 = sbr.rel (0) target = $region13
    $region12: #{convnet5_forward.1} parent=1 // pred_region
      _
    $region13: #{convnet5_forward.1} parent=1 // pred_fallthru
      _
    // Predicated region
    $region14: #{convnet5_forward.1} parent=1 // pred_check
      _
    $region15: #{convnet5_forward.1} parent=1 // pred_check_branch
      %26 = sbr.rel (0) target = $region17
    $region16: #{convnet5_forward.1} parent=1 // pred_region
      _
    $region17: #{convnet5_forward.1} parent=1 // pred_fallthru
      _
    // Predicated region
    $region18: #{convnet5_forward.1} parent=1 // pred_check
      _
    $region19: #{convnet5_forward.1} parent=1 // pred_check_branch
      %28 = sbr.rel (0) target = $region21
    $region20: #{convnet5_forward.1} parent=1 // pred_region
      _
    $region21: #{convnet5_forward.1} parent=1 // pred_fallthru
      _
    // Predicated region
    $region22: #{convnet5_forward.1} parent=1 // pred_check
      _
    $region23: #{convnet5_forward.1} parent=1 // pred_check_branch
      %30 = sbr.rel (0) target = $region25
    $region24: #{convnet5_forward.1} parent=1 // pred_region
      _
    $region25: #{convnet5_forward.1} parent=1 // pred_fallthru
      _
    // Predicated region
    $region26: #{convnet5_forward.1} parent=1 // pred_check
      _
    $region27: #{convnet5_forward.1} parent=1 // pred_check_branch
      %32 = sbr.rel (0) target = $region29
    $region28: #{convnet5_forward.1} parent=1 // pred_region
      _
    $region29: #{convnet5_forward.1} parent=1 // pred_fallthru
      _
    // Predicated region
    $region30: #{convnet5_forward.1} parent=1 // pred_check
      _
    $region31: #{convnet5_forward.1} parent=1 // pred_check_branch
      %34 = sbr.rel (0) target = $region33
    $region32: #{convnet5_forward.1} parent=1 // pred_region
      _
    $region33: #{convnet5_forward.1} parent=1 // pred_fallthru
      _
    // Predicated region
    $region34: #{convnet5_forward.1} parent=1 // pred_check
      _
    $region35: #{convnet5_forward.1} parent=1 // pred_check_branch
      %36 = sbr.rel (0) target = $region37
    $region36: #{convnet5_forward.1} parent=1 // pred_region
      _
    $region37: #{convnet5_forward.1} parent=1 // pred_fallthru
      _
    // Predicated region
    $region38: #{convnet5_forward.1} parent=1 // pred_check
      _
    $region39: #{convnet5_forward.1} parent=1 // pred_check_branch
      %38 = sbr.rel (0) target = $region41
    $region40: #{convnet5_forward.1} parent=1 // pred_region
      _
    $region41: #{convnet5_forward.1} parent=1 // pred_fallthru
      _
    // Predicated region
    $region42: #{convnet5_forward.1} parent=1 // pred_check
      _
    $region43: #{convnet5_forward.1} parent=1 // pred_check_branch
      %40 = sbr.rel (0) target = $region45
    $region44: #{convnet5_forward.1} parent=1 // pred_region
      _
    $region45: #{convnet5_forward.1} parent=1 // pred_fallthru
      _
    // Predicated region
    $region46: #{convnet5_forward.1} parent=1 // pred_check
      _
    $region47: #{convnet5_forward.1} parent=1 // pred_check_branch
      %42 = sbr.rel (0) target = $region49
    $region48: #{convnet5_forward.1} parent=1 // pred_region
      _
    $region49: #{convnet5_forward.1} parent=1 // pred_fallthru
      _
    // Predicated region
    $region50: #{convnet5_forward.1} parent=1 // pred_check
      _
    $region51: #{convnet5_forward.1} parent=1 // pred_check_branch
      %44 = sbr.rel (0) target = $region53
    $region52: #{convnet5_forward.1} parent=1 // pred_region
      _
    $region53: #{convnet5_forward.1} parent=1 // pred_fallthru
      _
    %vm46 = vcmask 523264
    %47 = vst.msk [vmem:[#allocation2] sm:$0xff] %vm46, 0.0
    %48 = vst.msk [vmem:[#allocation2 + $0x8] sm:$0xff] %vm46, 0.0
    %49 = vst.msk [vmem:[#allocation2 + $0x10] sm:$0xff] %vm46, 0.0
    %50 = vst.msk [vmem:[#allocation2 + $0x18] sm:$0xff] %vm46, 0.0
    %51 = vst.msk [vmem:[#allocation2 + $0x20] sm:$0xff] %vm46, 0.0
    %52 = vst.msk [vmem:[#allocation2 + $0x28] sm:$0xff] %vm46, 0.0
    %v53 = vld [vmem:[%s0] sm:$0xff]
    %v54 = vld [vmem:[%s0 + $0x8] sm:$0xff]
    %v55 = vld [vmem:[%s0 + $0x10] sm:$0xff]
    %v56 = vld [vmem:[%s0 + $0x18] sm:$0xff]
    %57 = vst.msk [vmem:[#allocation2 + $0x8] sm:$0xff] %vm46, %v53
    %58 = vst.msk [vmem:[#allocation2 + $0x10] sm:$0xff] %vm46, %v54
    %59 = vst.msk [vmem:[#allocation2 + $0x18] sm:$0xff] %vm46, %v55
    %60 = vst.msk [vmem:[#allocation2 + $0x20] sm:$0xff] %vm46, %v56
    %v61 = vld [vmem:[#allocation2 + $0x7] sm:$0xff]
    %v62 = vld [vmem:[#allocation2 + $0xf] sm:$0xff]
    %v63 = vld [vmem:[#allocation2 + $0x17] sm:$0xff]
    %v64 = vld [vmem:[#allocation2 + $0x1f] sm:$0xff]
    %v65 = vld [vmem:[#allocation2 + $0x9] sm:$0xff]
    %v66 = vld [vmem:[#allocation2 + $0x11] sm:$0xff]
    %v67 = vld [vmem:[#allocation2 + $0x19] sm:$0xff]
    %v68 = vld [vmem:[#allocation2 + $0x21] sm:$0xff]
    %v69 = vlaneseq
    %v70 = vshrl.u32 %v69, 7
    %v71 = vadd.s32 %v70, 8
    %v72 = vadd.s32 %v70, 16
    %v73 = vadd.s32 %v70, 24
    %v74 = vand.u32 %v70, 15
    %v75 = vand.u32 %v71, 15
    %v76 = vand.u32 %v72, 15
    %v77 = vand.u32 %v73, 15
    %vm78 = vcmp.eq.s32.totalorder %v74, 0
    %vm79 = vcmp.eq.s32.totalorder %v75, 0
    %vm80 = vcmp.eq.s32.totalorder %v76, 0
    %vm81 = vcmp.eq.s32.totalorder %v77, 0
    %v82 = vsel %vm78, 0.0, %v61
    %v83 = vsel %vm79, 0.0, %v62
    %v84 = vsel %vm80, 0.0, %v63
    %v85 = vsel %vm81, 0.0, %v64
    %vm86 = vcmp.eq.s32.totalorder %v74, 15
    %vm87 = vcmp.eq.s32.totalorder %v75, 15
    %vm88 = vcmp.eq.s32.totalorder %v76, 15
    %vm89 = vcmp.eq.s32.totalorder %v77, 15
    %v90 = vsel %vm86, 0.0, %v65
    %v91 = vsel %vm87, 0.0, %v66
    %v92 = vsel %vm88, 0.0, %v67
    %v93 = vsel %vm89, 0.0, %v68
    %v94 = vld [vmem:[%s1] sm:$0xf]
    %v95 = vld [vmem:[%s1 + $0x4] sm:$0xf]
    %v96 = vld [vmem:[%s1 + $0x8] sm:$0xf]
    %v97 = vld [vmem:[%s1 + $0xc] sm:$0xf]
    %v98 = vld [vmem:[%s1 + $0x10] sm:$0xf]
    %v99 = vld [vmem:[%s1 + $0x14] sm:$0xf]
    %v100 = vld [vmem:[%s1 + $0x18] sm:$0xf]
    %v101 = vld [vmem:[%s1 + $0x1c] sm:$0xf]
    %v102 = vpack.c.bf16 %v83, %v82
    %v103 = vpack.c.bf16 %v85, %v84
    %s104 = scalar_lea.vmem %s1, 32
    %v105 = vld [vmem:[%s104] sm:$0xf]
    %v106 = vld [vmem:[%s104 + $0x4] sm:$0xf]
    %v107 = vld [vmem:[%s104 + $0x8] sm:$0xf]
    %v108 = vld [vmem:[%s104 + $0xc] sm:$0xf]
    %v109 = vld [vmem:[%s104 + $0x10] sm:$0xf]
    %v110 = vld [vmem:[%s104 + $0x14] sm:$0xf]
    %v111 = vld [vmem:[%s104 + $0x18] sm:$0xf]
    %v112 = vld [vmem:[%s104 + $0x1c] sm:$0xf]
    %v113 = vpack.c.bf16 %v54, %v53
    %v114 = vpack.c.bf16 %v56, %v55
    %v123 = vunpack.c.l.b16 %v105
    %v124 = vunpack.c.l.b16 %v106
    %v125 = vunpack.c.l.b16 %v107
    %v126 = vunpack.c.l.b16 %v108
    %v127 = vunpack.c.l.b16 %v109
    %v128 = vunpack.c.l.b16 %v110
    %v129 = vunpack.c.l.b16 %v111
    %v130 = vunpack.c.l.b16 %v112
    %v131 = vpack.c.b16 %v124, %v123
    %v132 = vpack.c.b16 %v126, %v125
    %v133 = vpack.c.b16 %v128, %v127
    %v134 = vpack.c.b16 %v130, %v129
    %v140 = vsel %vm46, %v113, 0
    %v143 = vsel %vm46, %v114, 0
    %145 = vmatpush.bf16.msra.mxu0 0
    %146 = vmatpush.bf16.msra.mxu0 0
    %147 = vmatpush.bf16.msra.mxu0 0
    %148 = vmatpush.bf16.msra.mxu0 0
    %149 = vmatpush.bf16.msra.mxu0 %v134
    %150 = vmatpush.bf16.msra.mxu0 %v133
    %151 = vmatpush.bf16.msra.mxu0 %v132
    %152 = vmatpush.bf16.msra.mxu0 %v131
    %153 = vmatmul.bf16.gmra.mxu0 %v140
    %v154 = vpop.f32.mrf.mxu0
    %v155 = vadd.f32 0.0, %v154
    %v156 = vpop.f32.mrf.mxu0
    %v157 = vadd.f32 0.0, %v156
    %158 = vmatmul.bf16.gmra.mxu0 %v143
    %v159 = vpop.f32.mrf.mxu0
    %v160 = vadd.f32 0.0, %v159
    %v161 = vpop.f32.mrf.mxu0
    %v162 = vadd.f32 0.0, %v161
    %163 = vdwg.mxu0
    %v172 = vunpack.c.l.b16 %v94
    %v173 = vunpack.c.l.b16 %v95
    %v174 = vunpack.c.l.b16 %v96
    %v175 = vunpack.c.l.b16 %v97
    %v176 = vunpack.c.l.b16 %v98
    %v177 = vunpack.c.l.b16 %v99
    %v178 = vunpack.c.l.b16 %v100
    %v179 = vunpack.c.l.b16 %v101
    %v180 = vpack.c.b16 %v173, %v172
    %v181 = vpack.c.b16 %v175, %v174
    %v182 = vpack.c.b16 %v177, %v176
    %v183 = vpack.c.b16 %v179, %v178
    %v189 = vsel %vm46, %v102, 0
    %v192 = vsel %vm46, %v103, 0
    %194 = vmatpush.bf16.msra.mxu0 0
    %195 = vmatpush.bf16.msra.mxu0 0
    %196 = vmatpush.bf16.msra.mxu0 0
    %197 = vmatpush.bf16.msra.mxu0 0
    %198 = vmatpush.bf16.msra.mxu0 %v183
    %199 = vmatpush.bf16.msra.mxu0 %v182
    %200 = vmatpush.bf16.msra.mxu0 %v181
    %201 = vmatpush.bf16.msra.mxu0 %v180
    %202 = vmatmul.bf16.gmra.mxu0 %v189
    %v203 = vpop.f32.mrf.mxu0
    %v204 = vadd.f32 %v155, %v203
    %v205 = vpop.f32.mrf.mxu0
    %v206 = vadd.f32 %v157, %v205
    %207 = vmatmul.bf16.gmra.mxu0 %v192
    %v208 = vpop.f32.mrf.mxu0
    %v209 = vadd.f32 %v160, %v208
    %v210 = vpop.f32.mrf.mxu0
    %v211 = vadd.f32 %v162, %v210
    %212 = vdwg.mxu0
    %s213 = scalar_lea.vmem %s1, 64
    %v214 = vld [vmem:[%s213] sm:$0xf]
    %v215 = vld [vmem:[%s213 + $0x4] sm:$0xf]
    %v216 = vld [vmem:[%s213 + $0x8] sm:$0xf]
    %v217 = vld [vmem:[%s213 + $0xc] sm:$0xf]
    %v218 = vld [vmem:[%s213 + $0x10] sm:$0xf]
    %v219 = vld [vmem:[%s213 + $0x14] sm:$0xf]
    %v220 = vld [vmem:[%s213 + $0x18] sm:$0xf]
    %v221 = vld [vmem:[%s213 + $0x1c] sm:$0xf]
    %v222 = vpack.c.bf16 %v91, %v90
    %v223 = vpack.c.bf16 %v93, %v92
    %v232 = vunpack.c.l.b16 %v214
    %v233 = vunpack.c.l.b16 %v215
    %v234 = vunpack.c.l.b16 %v216
    %v235 = vunpack.c.l.b16 %v217
    %v236 = vunpack.c.l.b16 %v218
    %v237 = vunpack.c.l.b16 %v219
    %v238 = vunpack.c.l.b16 %v220
    %v239 = vunpack.c.l.b16 %v221
    %v240 = vpack.c.b16 %v233, %v232
    %v241 = vpack.c.b16 %v235, %v234
    %v242 = vpack.c.b16 %v237, %v236
    %v243 = vpack.c.b16 %v239, %v238
    %v249 = vsel %vm46, %v222, 0
    %v252 = vsel %vm46, %v223, 0
    %254 = vmatpush.bf16.msra.mxu0 0
    %255 = vmatpush.bf16.msra.mxu0 0
    %256 = vmatpush.bf16.msra.mxu0 0
    %257 = vmatpush.bf16.msra.mxu0 0
    %258 = vmatpush.bf16.msra.mxu0 %v243
    %259 = vmatpush.bf16.msra.mxu0 %v242
    %260 = vmatpush.bf16.msra.mxu0 %v241
    %261 = vmatpush.bf16.msra.mxu0 %v240
    %262 = vmatmul.bf16.gmra.mxu0 %v249
    %v263 = vpop.f32.mrf.mxu0
    %v264 = vadd.f32 0.0, %v263
    %v265 = vpop.f32.mrf.mxu0
    %v266 = vadd.f32 0.0, %v265
    %267 = vmatmul.bf16.gmra.mxu0 %v252
    %v268 = vpop.f32.mrf.mxu0
    %v269 = vadd.f32 0.0, %v268
    %v270 = vpop.f32.mrf.mxu0
    %v271 = vadd.f32 0.0, %v270
    %272 = vdwg.mxu0
    %v273 = vadd.f32 %v204, %v264
    %v274 = vadd.f32 %v206, %v266
    %v275 = vadd.f32 %v209, %v269
    %v276 = vadd.f32 %v211, %v271
    %v277 = vld [vmem:[%s2] sm:$0x1]
    %v279 = vperm.slane %v277, 0
    %v281 = vadd.f32 %v273, %v279
    %v282 = vadd.f32 %v274, %v279
    %v283 = vadd.f32 %v275, %v279
    %v284 = vadd.f32 %v276, %v279
    %v285 = vmax.f32 %v281, 0.0
    %v286 = vmax.f32 %v282, 0.0
    %v287 = vmax.f32 %v283, 0.0
    %v288 = vmax.f32 %v284, 0.0
    %v289 = vld [vmem:[%s3] sm:$0xf]
    %v290 = vld [vmem:[%s3 + $0x4] sm:$0xf]
    %v291 = vld [vmem:[%s3 + $0x8] sm:$0xf]
    %v292 = vld [vmem:[%s3 + $0xc] sm:$0xf]
    %v293 = vld [vmem:[%s3 + $0x10] sm:$0xf]
    %v294 = vld [vmem:[%s3 + $0x14] sm:$0xf]
    %v295 = vld [vmem:[%s3 + $0x18] sm:$0xf]
    %v296 = vld [vmem:[%s3 + $0x1c] sm:$0xf]
    %v297 = vld [vmem:[%s3 + $0x20] sm:$0xf]
    %v298 = vld [vmem:[%s3 + $0x24] sm:$0xf]
    %v299 = vld [vmem:[%s3 + $0x28] sm:$0xf]
    %v300 = vld [vmem:[%s3 + $0x2c] sm:$0xf]
    %v301 = vld [vmem:[%s3 + $0x30] sm:$0xf]
    %v302 = vld [vmem:[%s3 + $0x34] sm:$0xf]
    %v303 = vld [vmem:[%s3 + $0x38] sm:$0xf]
    %v304 = vld [vmem:[%s3 + $0x3c] sm:$0xf]
    %v305 = vpack.c.bf16 %v286, %v285
    %v306 = vpack.c.bf16 %v288, %v287
    %v323 = vunpack.c.l.b16 %v289
    %v324 = vunpack.c.l.b16 %v290
    %v325 = vunpack.c.l.b16 %v291
    %v326 = vunpack.c.l.b16 %v292
    %v327 = vunpack.c.l.b16 %v293
    %v328 = vunpack.c.l.b16 %v294
    %v329 = vunpack.c.l.b16 %v295
    %v330 = vunpack.c.l.b16 %v296
    %v331 = vunpack.c.l.b16 %v297
    %v332 = vunpack.c.l.b16 %v298
    %v333 = vunpack.c.l.b16 %v299
    %v334 = vunpack.c.l.b16 %v300
    %v335 = vunpack.c.l.b16 %v301
    %v336 = vunpack.c.l.b16 %v302
    %v337 = vunpack.c.l.b16 %v303
    %v338 = vunpack.c.l.b16 %v304
    %v339 = vpack.c.b16 %v324, %v323
    %v340 = vpack.c.b16 %v326, %v325
    %v341 = vpack.c.b16 %v328, %v327
    %v342 = vpack.c.b16 %v330, %v329
    %v343 = vpack.c.b16 %v332, %v331
    %v344 = vpack.c.b16 %v334, %v333
    %v345 = vpack.c.b16 %v336, %v335
    %v346 = vpack.c.b16 %v338, %v337
    %355 = vmatpush.bf16.msra.mxu0 %v346
    %356 = vmatpush.bf16.msra.mxu0 %v345
    %357 = vmatpush.bf16.msra.mxu0 %v344
    %358 = vmatpush.bf16.msra.mxu0 %v343
    %359 = vmatpush.bf16.msra.mxu0 %v342
    %360 = vmatpush.bf16.msra.mxu0 %v341
    %361 = vmatpush.bf16.msra.mxu0 %v340
    %362 = vmatpush.bf16.msra.mxu0 %v339
    %363 = vmatmul.bf16.gmra.mxu0 %v305
    %v364 = vpop.f32.mrf.mxu0
    %v365 = vadd.f32 0.0, %v364
    %v366 = vpop.f32.mrf.mxu0
    %v367 = vadd.f32 0.0, %v366
    %368 = vmatmul.bf16.gmra.mxu0 %v306
    %v369 = vpop.f32.mrf.mxu0
    %v370 = vadd.f32 0.0, %v369
    %v371 = vpop.f32.mrf.mxu0
    %v372 = vadd.f32 0.0, %v371
    %373 = vdwg.mxu0
    %s374 = scalar_lea.vmem %s3, 64
    %v375 = vld [vmem:[%s374] sm:$0xf]
    %v376 = vld [vmem:[%s374 + $0x4] sm:$0xf]
    %v377 = vld [vmem:[%s374 + $0x8] sm:$0xf]
    %v378 = vld [vmem:[%s374 + $0xc] sm:$0xf]
    %v379 = vld [vmem:[%s374 + $0x10] sm:$0xf]
    %v380 = vld [vmem:[%s374 + $0x14] sm:$0xf]
    %v381 = vld [vmem:[%s374 + $0x18] sm:$0xf]
    %v382 = vld [vmem:[%s374 + $0x1c] sm:$0xf]
    %v383 = vld [vmem:[%s374 + $0x20] sm:$0xf]
    %v384 = vld [vmem:[%s374 + $0x24] sm:$0xf]
    %v385 = vld [vmem:[%s374 + $0x28] sm:$0xf]
    %v386 = vld [vmem:[%s374 + $0x2c] sm:$0xf]
    %v387 = vld [vmem:[%s374 + $0x30] sm:$0xf]
    %v388 = vld [vmem:[%s374 + $0x34] sm:$0xf]
    %v389 = vld [vmem:[%s374 + $0x38] sm:$0xf]
    %v390 = vld [vmem:[%s374 + $0x3c] sm:$0xf]
    %v407 = vunpack.c.l.b16 %v375
    %v408 = vunpack.c.l.b16 %v376
    %v409 = vunpack.c.l.b16 %v377
    %v410 = vunpack.c.l.b16 %v378
    %v411 = vunpack.c.l.b16 %v379
    %v412 = vunpack.c.l.b16 %v380
    %v413 = vunpack.c.l.b16 %v381
    %v414 = vunpack.c.l.b16 %v382
    %v415 = vunpack.c.l.b16 %v383
    %v416 = vunpack.c.l.b16 %v384
    %v417 = vunpack.c.l.b16 %v385
    %v418 = vunpack.c.l.b16 %v386
    %v419 = vunpack.c.l.b16 %v387
    %v420 = vunpack.c.l.b16 %v388
    %v421 = vunpack.c.l.b16 %v389
    %v422 = vunpack.c.l.b16 %v390
    %v423 = vpack.c.b16 %v408, %v407
    %v424 = vpack.c.b16 %v410, %v409
    %v425 = vpack.c.b16 %v412, %v411
    %v426 = vpack.c.b16 %v414, %v413
    %v427 = vpack.c.b16 %v416, %v415
    %v428 = vpack.c.b16 %v418, %v417
    %v429 = vpack.c.b16 %v420, %v419
    %v430 = vpack.c.b16 %v422, %v421
    %439 = vmatpush.bf16.msra.mxu0 %v430
    %440 = vmatpush.bf16.msra.mxu0 %v429
    %441 = vmatpush.bf16.msra.mxu0 %v428
    %442 = vmatpush.bf16.msra.mxu0 %v427
    %443 = vmatpush.bf16.msra.mxu0 %v426
    %444 = vmatpush.bf16.msra.mxu0 %v425
    %445 = vmatpush.bf16.msra.mxu0 %v424
    %446 = vmatpush.bf16.msra.mxu0 %v423
    %447 = vmatmul.bf16.gmra.mxu0 %v305
    %v448 = vpop.f32.mrf.mxu0
    %v449 = vadd.f32 0.0, %v448
    %v450 = vpop.f32.mrf.mxu0
    %v451 = vadd.f32 0.0, %v450
    %452 = vmatmul.bf16.gmra.mxu0 %v306
    %v453 = vpop.f32.mrf.mxu0
    %v454 = vadd.f32 0.0, %v453
    %v455 = vpop.f32.mrf.mxu0
    %v456 = vadd.f32 0.0, %v455
    %457 = vdwg.mxu0
    %v458 = vmax.f32 %v365, %v449
    %v459 = vmax.f32 %v367, %v451
    %v460 = vmax.f32 %v370, %v454
    %v461 = vmax.f32 %v372, %v456
    %462 = vst.msk [vmem:[#allocation3] sm:$0xff] %vm46, %v458
    %463 = vst.msk [vmem:[#allocation3 + $0x8] sm:$0xff] %vm46, %v459
    %464 = vst.msk [vmem:[#allocation3 + $0x10] sm:$0xff] %vm46, %v460
    %465 = vst.msk [vmem:[#allocation3 + $0x18] sm:$0xff] %vm46, %v461
    %v466 = vld [vmem:[#allocation3] ss:$2 sm:$0xff]
    %s467 = scalar_lea.vmem [#allocation3], 16
    %v468 = vld [vmem:[%s467] ss:$2 sm:$0xff]
    %s469 = scalar_lea.vmem [#allocation3], 1
    %v470 = vld [vmem:[%s469] ss:$2 sm:$0xff]
    %s471 = scalar_lea.vmem [#allocation3], 17
    %v472 = vld [vmem:[%s471] ss:$2 sm:$0xff]
    %v473 = vmax.f32 %v466, %v470
    %v474 = vmax.f32 %v468, %v472
    %475 = vst.msk [vmem:[#allocation2 + $0x8] sm:$0xff] %vm46, %v473
    %476 = vst.msk [vmem:[#allocation2 + $0x10] sm:$0xff] %vm46, %v474
    %v477 = vld [vmem:[#allocation2 + $0x7] sm:$0xff]
    %v478 = vld [vmem:[#allocation2 + $0xf] sm:$0xff]
    %v479 = vld [vmem:[#allocation2 + $0x9] sm:$0xff]
    %v480 = vld [vmem:[#allocation2 + $0x11] sm:$0xff]
    %v481 = vand.u32 %v70, 7
    %v482 = vand.u32 %v71, 7
    %vm483 = vcmp.eq.s32.totalorder %v481, 0
    %vm484 = vcmp.eq.s32.totalorder %v482, 0
    %v485 = vsel %vm483, 0.0, %v477
    %v486 = vsel %vm484, 0.0, %v478
    %vm487 = vcmp.eq.s32.totalorder %v481, 7
    %vm488 = vcmp.eq.s32.totalorder %v482, 7
    %v489 = vsel %vm487, 0.0, %v479
    %v490 = vsel %vm488, 0.0, %v480
    %v491 = vld [vmem:[%s4] sm:$0xf]
    %v492 = vld [vmem:[%s4 + $0x4] sm:$0xf]
    %v493 = vld [vmem:[%s4 + $0x8] sm:$0xf]
    %v494 = vld [vmem:[%s4 + $0xc] sm:$0xf]
    %v495 = vld [vmem:[%s4 + $0x10] sm:$0xf]
    %v496 = vld [vmem:[%s4 + $0x14] sm:$0xf]
    %v497 = vld [vmem:[%s4 + $0x18] sm:$0xf]
    %v498 = vld [vmem:[%s4 + $0x1c] sm:$0xf]
    %v499 = vpack.c.bf16 %v486, %v485
    %s500 = scalar_lea.vmem %s4, 32
    %v501 = vld [vmem:[%s500] sm:$0xf]
    %v502 = vld [vmem:[%s500 + $0x4] sm:$0xf]
    %v503 = vld [vmem:[%s500 + $0x8] sm:$0xf]
    %v504 = vld [vmem:[%s500 + $0xc] sm:$0xf]
    %v505 = vld [vmem:[%s500 + $0x10] sm:$0xf]
    %v506 = vld [vmem:[%s500 + $0x14] sm:$0xf]
    %v507 = vld [vmem:[%s500 + $0x18] sm:$0xf]
    %v508 = vld [vmem:[%s500 + $0x1c] sm:$0xf]
    %v509 = vpack.c.bf16 %v474, %v473
    %v518 = vunpack.c.l.b16 %v501
    %v519 = vunpack.c.l.b16 %v502
    %v520 = vunpack.c.l.b16 %v503
    %v521 = vunpack.c.l.b16 %v504
    %v522 = vunpack.c.l.b16 %v505
    %v523 = vunpack.c.l.b16 %v506
    %v524 = vunpack.c.l.b16 %v507
    %v525 = vunpack.c.l.b16 %v508
    %v526 = vpack.c.b16 %v519, %v518
    %v527 = vpack.c.b16 %v521, %v520
    %v528 = vpack.c.b16 %v523, %v522
    %v529 = vpack.c.b16 %v525, %v524
    %v535 = vsel %vm46, %v509, 0
    %537 = vmatpush.bf16.msra.mxu0 0
    %538 = vmatpush.bf16.msra.mxu0 0
    %539 = vmatpush.bf16.msra.mxu0 0
    %540 = vmatpush.bf16.msra.mxu0 0
    %541 = vmatpush.bf16.msra.mxu0 %v529
    %542 = vmatpush.bf16.msra.mxu0 %v528
    %543 = vmatpush.bf16.msra.mxu0 %v527
    %544 = vmatpush.bf16.msra.mxu0 %v526
    %545 = vmatmul.bf16.gmra.mxu0 %v535
    %v546 = vpop.f32.mrf.mxu0
    %v547 = vadd.f32 0.0, %v546
    %v548 = vpop.f32.mrf.mxu0
    %v549 = vadd.f32 0.0, %v548
    %550 = vdwg.mxu0
    %v559 = vunpack.c.l.b16 %v491
    %v560 = vunpack.c.l.b16 %v492
    %v561 = vunpack.c.l.b16 %v493
    %v562 = vunpack.c.l.b16 %v494
    %v563 = vunpack.c.l.b16 %v495
    %v564 = vunpack.c.l.b16 %v496
    %v565 = vunpack.c.l.b16 %v497
    %v566 = vunpack.c.l.b16 %v498
    %v567 = vpack.c.b16 %v560, %v559
    %v568 = vpack.c.b16 %v562, %v561
    %v569 = vpack.c.b16 %v564, %v563
    %v570 = vpack.c.b16 %v566, %v565
    %v576 = vsel %vm46, %v499, 0
    %578 = vmatpush.bf16.msra.mxu0 0
    %579 = vmatpush.bf16.msra.mxu0 0
    %580 = vmatpush.bf16.msra.mxu0 0
    %581 = vmatpush.bf16.msra.mxu0 0
    %582 = vmatpush.bf16.msra.mxu0 %v570
    %583 = vmatpush.bf16.msra.mxu0 %v569
    %584 = vmatpush.bf16.msra.mxu0 %v568
    %585 = vmatpush.bf16.msra.mxu0 %v567
    %586 = vmatmul.bf16.gmra.mxu0 %v576
    %v587 = vpop.f32.mrf.mxu0
    %v588 = vadd.f32 %v547, %v587
    %v589 = vpop.f32.mrf.mxu0
    %v590 = vadd.f32 %v549, %v589
    %591 = vdwg.mxu0
    %s592 = scalar_lea.vmem %s4, 64
    %v593 = vld [vmem:[%s592] sm:$0xf]
    %v594 = vld [vmem:[%s592 + $0x4] sm:$0xf]
    %v595 = vld [vmem:[%s592 + $0x8] sm:$0xf]
    %v596 = vld [vmem:[%s592 + $0xc] sm:$0xf]
    %v597 = vld [vmem:[%s592 + $0x10] sm:$0xf]
    %v598 = vld [vmem:[%s592 + $0x14] sm:$0xf]
    %v599 = vld [vmem:[%s592 + $0x18] sm:$0xf]
    %v600 = vld [vmem:[%s592 + $0x1c] sm:$0xf]
    %v601 = vpack.c.bf16 %v490, %v489
    %v610 = vunpack.c.l.b16 %v593
    %v611 = vunpack.c.l.b16 %v594
    %v612 = vunpack.c.l.b16 %v595
    %v613 = vunpack.c.l.b16 %v596
    %v614 = vunpack.c.l.b16 %v597
    %v615 = vunpack.c.l.b16 %v598
    %v616 = vunpack.c.l.b16 %v599
    %v617 = vunpack.c.l.b16 %v600
    %v618 = vpack.c.b16 %v611, %v610
    %v619 = vpack.c.b16 %v613, %v612
    %v620 = vpack.c.b16 %v615, %v614
    %v621 = vpack.c.b16 %v617, %v616
    %v627 = vsel %vm46, %v601, 0
    %629 = vmatpush.bf16.msra.mxu0 0
    %630 = vmatpush.bf16.msra.mxu0 0
    %631 = vmatpush.bf16.msra.mxu0 0
    %632 = vmatpush.bf16.msra.mxu0 0
    %633 = vmatpush.bf16.msra.mxu0 %v621
    %634 = vmatpush.bf16.msra.mxu0 %v620
    %635 = vmatpush.bf16.msra.mxu0 %v619
    %636 = vmatpush.bf16.msra.mxu0 %v618
    %637 = vmatmul.bf16.gmra.mxu0 %v627
    %v638 = vpop.f32.mrf.mxu0
    %v639 = vadd.f32 0.0, %v638
    %v640 = vpop.f32.mrf.mxu0
    %v641 = vadd.f32 0.0, %v640
    %642 = vdwg.mxu0
    %v643 = vadd.f32 %v588, %v639
    %v644 = vadd.f32 %v590, %v641
    %v645 = vld [vmem:[%s5] sm:$0x1]
    %v647 = vperm.slane %v645, 0
    %v649 = vadd.f32 %v643, %v647
    %v650 = vadd.f32 %v644, %v647
    %v651 = vmax.f32 %v649, 0.0
    %v652 = vmax.f32 %v650, 0.0
    %v653 = vld [vmem:[%s6] sm:$0xf]
    %v654 = vld [vmem:[%s6 + $0x4] sm:$0xf]
    %v655 = vld [vmem:[%s6 + $0x8] sm:$0xf]
    %v656 = vld [vmem:[%s6 + $0xc] sm:$0xf]
    %v657 = vld [vmem:[%s6 + $0x10] sm:$0xf]
    %v658 = vld [vmem:[%s6 + $0x14] sm:$0xf]
    %v659 = vld [vmem:[%s6 + $0x18] sm:$0xf]
    %v660 = vld [vmem:[%s6 + $0x1c] sm:$0xf]
    %v661 = vld [vmem:[%s6 + $0x20] sm:$0xf]
    %v662 = vld [vmem:[%s6 + $0x24] sm:$0xf]
    %v663 = vld [vmem:[%s6 + $0x28] sm:$0xf]
    %v664 = vld [vmem:[%s6 + $0x2c] sm:$0xf]
    %v665 = vld [vmem:[%s6 + $0x30] sm:$0xf]
    %v666 = vld [vmem:[%s6 + $0x34] sm:$0xf]
    %v667 = vld [vmem:[%s6 + $0x38] sm:$0xf]
    %v668 = vld [vmem:[%s6 + $0x3c] sm:$0xf]
    %v669 = vpack.c.bf16 %v652, %v651
    %v686 = vunpack.c.l.b16 %v653
    %v687 = vunpack.c.l.b16 %v654
    %v688 = vunpack.c.l.b16 %v655
    %v689 = vunpack.c.l.b16 %v656
    %v690 = vunpack.c.l.b16 %v657
    %v691 = vunpack.c.l.b16 %v658
    %v692 = vunpack.c.l.b16 %v659
    %v693 = vunpack.c.l.b16 %v660
    %v694 = vunpack.c.l.b16 %v661
    %v695 = vunpack.c.l.b16 %v662
    %v696 = vunpack.c.l.b16 %v663
    %v697 = vunpack.c.l.b16 %v664
    %v698 = vunpack.c.l.b16 %v665
    %v699 = vunpack.c.l.b16 %v666
    %v700 = vunpack.c.l.b16 %v667
    %v701 = vunpack.c.l.b16 %v668
    %v702 = vpack.c.b16 %v687, %v686
    %v703 = vpack.c.b16 %v689, %v688
    %v704 = vpack.c.b16 %v691, %v690
    %v705 = vpack.c.b16 %v693, %v692
    %v706 = vpack.c.b16 %v695, %v694
    %v707 = vpack.c.b16 %v697, %v696
    %v708 = vpack.c.b16 %v699, %v698
    %v709 = vpack.c.b16 %v701, %v700
    %718 = vmatpush.bf16.msra.mxu0 %v709
    %719 = vmatpush.bf16.msra.mxu0 %v708
    %720 = vmatpush.bf16.msra.mxu0 %v707
    %721 = vmatpush.bf16.msra.mxu0 %v706
    %722 = vmatpush.bf16.msra.mxu0 %v705
    %723 = vmatpush.bf16.msra.mxu0 %v704
    %724 = vmatpush.bf16.msra.mxu0 %v703
    %725 = vmatpush.bf16.msra.mxu0 %v702
    %726 = vmatmul.bf16.gmra.mxu0 %v669
    %v727 = vpop.f32.mrf.mxu0
    %v728 = vadd.f32 0.0, %v727
    %v729 = vpop.f32.mrf.mxu0
    %v730 = vadd.f32 0.0, %v729
    %731 = vdwg.mxu0
    %s732 = scalar_lea.vmem %s6, 64
    %v733 = vld [vmem:[%s732] sm:$0xf]
    %v734 = vld [vmem:[%s732 + $0x4] sm:$0xf]
    %v735 = vld [vmem:[%s732 + $0x8] sm:$0xf]
    %v736 = vld [vmem:[%s732 + $0xc] sm:$0xf]
    %v737 = vld [vmem:[%s732 + $0x10] sm:$0xf]
    %v738 = vld [vmem:[%s732 + $0x14] sm:$0xf]
    %v739 = vld [vmem:[%s732 + $0x18] sm:$0xf]
    %v740 = vld [vmem:[%s732 + $0x1c] sm:$0xf]
    %v741 = vld [vmem:[%s732 + $0x20] sm:$0xf]
    %v742 = vld [vmem:[%s732 + $0x24] sm:$0xf]
    %v743 = vld [vmem:[%s732 + $0x28] sm:$0xf]
    %v744 = vld [vmem:[%s732 + $0x2c] sm:$0xf]
    %v745 = vld [vmem:[%s732 + $0x30] sm:$0xf]
    %v746 = vld [vmem:[%s732 + $0x34] sm:$0xf]
    %v747 = vld [vmem:[%s732 + $0x38] sm:$0xf]
    %v748 = vld [vmem:[%s732 + $0x3c] sm:$0xf]
    %v765 = vunpack.c.l.b16 %v733
    %v766 = vunpack.c.l.b16 %v734
    %v767 = vunpack.c.l.b16 %v735
    %v768 = vunpack.c.l.b16 %v736
    %v769 = vunpack.c.l.b16 %v737
    %v770 = vunpack.c.l.b16 %v738
    %v771 = vunpack.c.l.b16 %v739
    %v772 = vunpack.c.l.b16 %v740
    %v773 = vunpack.c.l.b16 %v741
    %v774 = vunpack.c.l.b16 %v742
    %v775 = vunpack.c.l.b16 %v743
    %v776 = vunpack.c.l.b16 %v744
    %v777 = vunpack.c.l.b16 %v745
    %v778 = vunpack.c.l.b16 %v746
    %v779 = vunpack.c.l.b16 %v747
    %v780 = vunpack.c.l.b16 %v748
    %v781 = vpack.c.b16 %v766, %v765
    %v782 = vpack.c.b16 %v768, %v767
    %v783 = vpack.c.b16 %v770, %v769
    %v784 = vpack.c.b16 %v772, %v771
    %v785 = vpack.c.b16 %v774, %v773
    %v786 = vpack.c.b16 %v776, %v775
    %v787 = vpack.c.b16 %v778, %v777
    %v788 = vpack.c.b16 %v780, %v779
    %797 = vmatpush.bf16.msra.mxu0 %v788
    %798 = vmatpush.bf16.msra.mxu0 %v787
    %799 = vmatpush.bf16.msra.mxu0 %v786
    %800 = vmatpush.bf16.msra.mxu0 %v785
    %801 = vmatpush.bf16.msra.mxu0 %v784
    %802 = vmatpush.bf16.msra.mxu0 %v783
    %803 = vmatpush.bf16.msra.mxu0 %v782
    %804 = vmatpush.bf16.msra.mxu0 %v781
    %805 = vmatmul.bf16.gmra.mxu0 %v669
    %v806 = vpop.f32.mrf.mxu0
    %v807 = vadd.f32 0.0, %v806
    %v808 = vpop.f32.mrf.mxu0
    %v809 = vadd.f32 0.0, %v808
    %810 = vdwg.mxu0
    %v811 = vmax.f32 %v728, %v807
    %v812 = vmax.f32 %v730, %v809
    %813 = vst.msk [vmem:[#allocation3] sm:$0xff] %vm46, %v811
    %814 = vst.msk [vmem:[#allocation3 + $0x8] sm:$0xff] %vm46, %v812
    %v815 = vld [vmem:[#allocation3] ss:$2 sm:$0xff]
    %v816 = vld [vmem:[%s469] ss:$2 sm:$0xff]
    %v817 = vmax.f32 %v815, %v816
    %818 = vst.msk [vmem:[#allocation2 + $0x8] sm:$0xff] %vm46, %v817
    %v819 = vld [vmem:[#allocation2 + $0x7] sm:$0xff]
    %v820 = vld [vmem:[#allocation2 + $0x9] sm:$0xff]
    %v821 = vand.u32 %v70, 3
    %vm822 = vcmp.eq.s32.totalorder %v821, 0
    %v823 = vsel %vm822, 0.0, %v819
    %vm824 = vcmp.eq.s32.totalorder %v821, 3
    %v825 = vsel %vm824, 0.0, %v820
    %v826 = vld [vmem:[%s7] sm:$0xf]
    %v827 = vld [vmem:[%s7 + $0x4] sm:$0xf]
    %v828 = vld [vmem:[%s7 + $0x8] sm:$0xf]
    %v829 = vld [vmem:[%s7 + $0xc] sm:$0xf]
    %v830 = vld [vmem:[%s7 + $0x10] sm:$0xf]
    %v831 = vld [vmem:[%s7 + $0x14] sm:$0xf]
    %v832 = vld [vmem:[%s7 + $0x18] sm:$0xf]
    %v833 = vld [vmem:[%s7 + $0x1c] sm:$0xf]
    %v834 = vpack.c.bf16 %v823, %v823
    %s835 = scalar_lea.vmem %s7, 32
    %v836 = vld [vmem:[%s835] sm:$0xf]
    %v837 = vld [vmem:[%s835 + $0x4] sm:$0xf]
    %v838 = vld [vmem:[%s835 + $0x8] sm:$0xf]
    %v839 = vld [vmem:[%s835 + $0xc] sm:$0xf]
    %v840 = vld [vmem:[%s835 + $0x10] sm:$0xf]
    %v841 = vld [vmem:[%s835 + $0x14] sm:$0xf]
    %v842 = vld [vmem:[%s835 + $0x18] sm:$0xf]
    %v843 = vld [vmem:[%s835 + $0x1c] sm:$0xf]
    %v844 = vpack.c.bf16 %v817, %v817
    %v853 = vunpack.c.l.b16 %v836
    %v854 = vunpack.c.l.b16 %v837
    %v855 = vunpack.c.l.b16 %v838
    %v856 = vunpack.c.l.b16 %v839
    %v857 = vunpack.c.l.b16 %v840
    %v858 = vunpack.c.l.b16 %v841
    %v859 = vunpack.c.l.b16 %v842
    %v860 = vunpack.c.l.b16 %v843
    %v861 = vpack.c.b16 %v854, %v853
    %v862 = vpack.c.b16 %v856, %v855
    %v863 = vpack.c.b16 %v858, %v857
    %v864 = vpack.c.b16 %v860, %v859
    %v870 = vsel %vm46, %v844, 0
    %872 = vmatpush.bf16.msra.mxu0 0
    %873 = vmatpush.bf16.msra.mxu0 0
    %874 = vmatpush.bf16.msra.mxu0 0
    %875 = vmatpush.bf16.msra.mxu0 0
    %876 = vmatpush.bf16.msra.mxu0 %v864
    %877 = vmatpush.bf16.msra.mxu0 %v863
    %878 = vmatpush.bf16.msra.mxu0 %v862
    %879 = vmatpush.bf16.msra.mxu0 %v861
    %880 = vmatmul.bf16.gmra.mxu0 %v870
    %v881 = vpop.f32.mrf.mxu0
    %v882 = vadd.f32 0.0, %v881
    %v883 = vpop.f32.mrf.mxu0
    %884 = vdwg.mxu0
    %v893 = vunpack.c.l.b16 %v826
    %v894 = vunpack.c.l.b16 %v827
    %v895 = vunpack.c.l.b16 %v828
    %v896 = vunpack.c.l.b16 %v829
    %v897 = vunpack.c.l.b16 %v830
    %v898 = vunpack.c.l.b16 %v831
    %v899 = vunpack.c.l.b16 %v832
    %v900 = vunpack.c.l.b16 %v833
    %v901 = vpack.c.b16 %v894, %v893
    %v902 = vpack.c.b16 %v896, %v895
    %v903 = vpack.c.b16 %v898, %v897
    %v904 = vpack.c.b16 %v900, %v899
    %v910 = vsel %vm46, %v834, 0
    %912 = vmatpush.bf16.msra.mxu0 0
    %913 = vmatpush.bf16.msra.mxu0 0
    %914 = vmatpush.bf16.msra.mxu0 0
    %915 = vmatpush.bf16.msra.mxu0 0
    %916 = vmatpush.bf16.msra.mxu0 %v904
    %917 = vmatpush.bf16.msra.mxu0 %v903
    %918 = vmatpush.bf16.msra.mxu0 %v902
    %919 = vmatpush.bf16.msra.mxu0 %v901
    %920 = vmatmul.bf16.gmra.mxu0 %v910
    %v921 = vpop.f32.mrf.mxu0
    %v922 = vadd.f32 %v882, %v921
    %v923 = vpop.f32.mrf.mxu0
    %924 = vdwg.mxu0
    %s925 = scalar_lea.vmem %s7, 64
    %v926 = vld [vmem:[%s925] sm:$0xf]
    %v927 = vld [vmem:[%s925 + $0x4] sm:$0xf]
    %v928 = vld [vmem:[%s925 + $0x8] sm:$0xf]
    %v929 = vld [vmem:[%s925 + $0xc] sm:$0xf]
    %v930 = vld [vmem:[%s925 + $0x10] sm:$0xf]
    %v931 = vld [vmem:[%s925 + $0x14] sm:$0xf]
    %v932 = vld [vmem:[%s925 + $0x18] sm:$0xf]
    %v933 = vld [vmem:[%s925 + $0x1c] sm:$0xf]
    %v934 = vpack.c.bf16 %v825, %v825
    %v943 = vunpack.c.l.b16 %v926
    %v944 = vunpack.c.l.b16 %v927
    %v945 = vunpack.c.l.b16 %v928
    %v946 = vunpack.c.l.b16 %v929
    %v947 = vunpack.c.l.b16 %v930
    %v948 = vunpack.c.l.b16 %v931
    %v949 = vunpack.c.l.b16 %v932
    %v950 = vunpack.c.l.b16 %v933
    %v951 = vpack.c.b16 %v944, %v943
    %v952 = vpack.c.b16 %v946, %v945
    %v953 = vpack.c.b16 %v948, %v947
    %v954 = vpack.c.b16 %v950, %v949
    %v960 = vsel %vm46, %v934, 0
    %962 = vmatpush.bf16.msra.mxu0 0
    %963 = vmatpush.bf16.msra.mxu0 0
    %964 = vmatpush.bf16.msra.mxu0 0
    %965 = vmatpush.bf16.msra.mxu0 0
    %966 = vmatpush.bf16.msra.mxu0 %v954
    %967 = vmatpush.bf16.msra.mxu0 %v953
    %968 = vmatpush.bf16.msra.mxu0 %v952
    %969 = vmatpush.bf16.msra.mxu0 %v951
    %970 = vmatmul.bf16.gmra.mxu0 %v960
    %v971 = vpop.f32.mrf.mxu0
    %v972 = vadd.f32 0.0, %v971
    %v973 = vpop.f32.mrf.mxu0
    %974 = vdwg.mxu0
    %v975 = vadd.f32 %v922, %v972
    %v976 = vld [vmem:[%s8] sm:$0x1]
    %v978 = vperm.slane %v976, 0
    %v980 = vadd.f32 %v975, %v978
    %v981 = vmax.f32 %v980, 0.0
    %982 = vst [vmem:[#allocation4] sm:$0xff] %v981
    %v983 = vld [vmem:[%s10] sm:$0x1]
    %v984 = vld [vmem:[#allocation4] ss:$4 sm:$0x3]
    %v985 = vld [vmem:[%s9] sm:$0xf]
    %v986 = vld [vmem:[%s9 + $0x4] sm:$0xf]
    %v987 = vld [vmem:[%s9 + $0x8] sm:$0xf]
    %v988 = vld [vmem:[%s9 + $0xc] sm:$0xf]
    %v989 = vld [vmem:[%s9 + $0x10] sm:$0xf]
    %v990 = vld [vmem:[%s9 + $0x14] sm:$0xf]
    %v991 = vld [vmem:[%s9 + $0x18] sm:$0xf]
    %v992 = vld [vmem:[%s9 + $0x1c] sm:$0xf]
    %v993 = vld [vmem:[%s9 + $0x20] sm:$0xf]
    %v994 = vld [vmem:[%s9 + $0x24] sm:$0xf]
    %v995 = vld [vmem:[%s9 + $0x28] sm:$0xf]
    %v996 = vld [vmem:[%s9 + $0x2c] sm:$0xf]
    %v997 = vld [vmem:[%s9 + $0x30] sm:$0xf]
    %v998 = vld [vmem:[%s9 + $0x34] sm:$0xf]
    %v999 = vld [vmem:[%s9 + $0x38] sm:$0xf]
    %v1000 = vld [vmem:[%s9 + $0x3c] sm:$0xf]
    %v1001 = vpack.c.bf16 %v984, %v984
    %v1018 = vunpack.c.l.b16 %v985
    %v1019 = vunpack.c.l.b16 %v986
    %v1020 = vunpack.c.l.b16 %v987
    %v1021 = vunpack.c.l.b16 %v988
    %v1022 = vunpack.c.l.b16 %v989
    %v1023 = vunpack.c.l.b16 %v990
    %v1024 = vunpack.c.l.b16 %v991
    %v1025 = vunpack.c.l.b16 %v992
    %v1026 = vunpack.c.l.b16 %v993
    %v1027 = vunpack.c.l.b16 %v994
    %v1028 = vunpack.c.l.b16 %v995
    %v1029 = vunpack.c.l.b16 %v996
    %v1030 = vunpack.c.l.b16 %v997
    %v1031 = vunpack.c.l.b16 %v998
    %v1032 = vunpack.c.l.b16 %v999
    %v1033 = vunpack.c.l.b16 %v1000
    %v1034 = vpack.c.b16 %v1019, %v1018
    %v1035 = vpack.c.b16 %v1021, %v1020
    %v1036 = vpack.c.b16 %v1023, %v1022
    %v1037 = vpack.c.b16 %v1025, %v1024
    %v1038 = vpack.c.b16 %v1027, %v1026
    %v1039 = vpack.c.b16 %v1029, %v1028
    %v1040 = vpack.c.b16 %v1031, %v1030
    %v1041 = vpack.c.b16 %v1033, %v1032
    %1050 = vmatpush.bf16.msra.mxu0 %v1041
    %1051 = vmatpush.bf16.msra.mxu0 %v1040
    %1052 = vmatpush.bf16.msra.mxu0 %v1039
    %1053 = vmatpush.bf16.msra.mxu0 %v1038
    %1054 = vmatpush.bf16.msra.mxu0 %v1037
    %1055 = vmatpush.bf16.msra.mxu0 %v1036
    %1056 = vmatpush.bf16.msra.mxu0 %v1035
    %1057 = vmatpush.bf16.msra.mxu0 %v1034
    %1058 = vmatmul.bf16.gmra.mxu0 %v1001
    %v1059 = vpop.f32.mrf.mxu0
    %v1060 = vadd.f32 0.0, %v1059
    %v1061 = vpop.f32.mrf.mxu0
    %1062 = vdwg.mxu0
    %v1064 = vperm.slane %v983, 0
    %v1066 = vadd.f32 %v1064, %v1060
    %s1067 = scalar_lea.vmem [#allocation4], 1
    %v1068 = vld [vmem:[%s1067] ss:$4 sm:$0x3]
    %s1069 = scalar_lea.vmem %s9, 64
    %v1070 = vld [vmem:[%s1069] sm:$0xf]
    %v1071 = vld [vmem:[%s1069 + $0x4] sm:$0xf]
    %v1072 = vld [vmem:[%s1069 + $0x8] sm:$0xf]
    %v1073 = vld [vmem:[%s1069 + $0xc] sm:$0xf]
    %v1074 = vld [vmem:[%s1069 + $0x10] sm:$0xf]
    %v1075 = vld [vmem:[%s1069 + $0x14] sm:$0xf]
    %v1076 = vld [vmem:[%s1069 + $0x18] sm:$0xf]
    %v1077 = vld [vmem:[%s1069 + $0x1c] sm:$0xf]
    %v1078 = vld [vmem:[%s1069 + $0x20] sm:$0xf]
    %v1079 = vld [vmem:[%s1069 + $0x24] sm:$0xf]
    %v1080 = vld [vmem:[%s1069 + $0x28] sm:$0xf]
    %v1081 = vld [vmem:[%s1069 + $0x2c] sm:$0xf]
    %v1082 = vld [vmem:[%s1069 + $0x30] sm:$0xf]
    %v1083 = vld [vmem:[%s1069 + $0x34] sm:$0xf]
    %v1084 = vld [vmem:[%s1069 + $0x38] sm:$0xf]
    %v1085 = vld [vmem:[%s1069 + $0x3c] sm:$0xf]
    %v1086 = vpack.c.bf16 %v1068, %v1068
    %v1103 = vunpack.c.l.b16 %v1070
    %v1104 = vunpack.c.l.b16 %v1071
    %v1105 = vunpack.c.l.b16 %v1072
    %v1106 = vunpack.c.l.b16 %v1073
    %v1107 = vunpack.c.l.b16 %v1074
    %v1108 = vunpack.c.l.b16 %v1075
    %v1109 = vunpack.c.l.b16 %v1076
    %v1110 = vunpack.c.l.b16 %v1077
    %v1111 = vunpack.c.l.b16 %v1078
    %v1112 = vunpack.c.l.b16 %v1079
    %v1113 = vunpack.c.l.b16 %v1080
    %v1114 = vunpack.c.l.b16 %v1081
    %v1115 = vunpack.c.l.b16 %v1082
    %v1116 = vunpack.c.l.b16 %v1083
    %v1117 = vunpack.c.l.b16 %v1084
    %v1118 = vunpack.c.l.b16 %v1085
    %v1119 = vpack.c.b16 %v1104, %v1103
    %v1120 = vpack.c.b16 %v1106, %v1105
    %v1121 = vpack.c.b16 %v1108, %v1107
    %v1122 = vpack.c.b16 %v1110, %v1109
    %v1123 = vpack.c.b16 %v1112, %v1111
    %v1124 = vpack.c.b16 %v1114, %v1113
    %v1125 = vpack.c.b16 %v1116, %v1115
    %v1126 = vpack.c.b16 %v1118, %v1117
    %1135 = vmatpush.bf16.msra.mxu0 %v1126
    %1136 = vmatpush.bf16.msra.mxu0 %v1125
    %1137 = vmatpush.bf16.msra.mxu0 %v1124
    %1138 = vmatpush.bf16.msra.mxu0 %v1123
    %1139 = vmatpush.bf16.msra.mxu0 %v1122
    %1140 = vmatpush.bf16.msra.mxu0 %v1121
    %1141 = vmatpush.bf16.msra.mxu0 %v1120
    %1142 = vmatpush.bf16.msra.mxu0 %v1119
    %1143 = vmatmul.bf16.gmra.mxu0 %v1086
    %v1144 = vpop.f32.mrf.mxu0
    %v1145 = vadd.f32 0.0, %v1144
    %v1146 = vpop.f32.mrf.mxu0
    %1147 = vdwg.mxu0
    %v1148 = vadd.f32 %v1066, %v1145
    %s1149 = scalar_lea.vmem [#allocation4], 2
    %v1150 = vld [vmem:[%s1149] ss:$4 sm:$0x3]
    %s1151 = scalar_lea.vmem %s9, 128
    %v1152 = vld [vmem:[%s1151] sm:$0xf]
    %v1153 = vld [vmem:[%s1151 + $0x4] sm:$0xf]
    %v1154 = vld [vmem:[%s1151 + $0x8] sm:$0xf]
    %v1155 = vld [vmem:[%s1151 + $0xc] sm:$0xf]
    %v1156 = vld [vmem:[%s1151 + $0x10] sm:$0xf]
    %v1157 = vld [vmem:[%s1151 + $0x14] sm:$0xf]
    %v1158 = vld [vmem:[%s1151 + $0x18] sm:$0xf]
    %v1159 = vld [vmem:[%s1151 + $0x1c] sm:$0xf]
    %v1160 = vld [vmem:[%s1151 + $0x20] sm:$0xf]
    %v1161 = vld [vmem:[%s1151 + $0x24] sm:$0xf]
    %v1162 = vld [vmem:[%s1151 + $0x28] sm:$0xf]
    %v1163 = vld [vmem:[%s1151 + $0x2c] sm:$0xf]
    %v1164 = vld [vmem:[%s1151 + $0x30] sm:$0xf]
    %v1165 = vld [vmem:[%s1151 + $0x34] sm:$0xf]
    %v1166 = vld [vmem:[%s1151 + $0x38] sm:$0xf]
    %v1167 = vld [vmem:[%s1151 + $0x3c] sm:$0xf]
    %v1168 = vpack.c.bf16 %v1150, %v1150
    %v1185 = vunpack.c.l.b16 %v1152
    %v1186 = vunpack.c.l.b16 %v1153
    %v1187 = vunpack.c.l.b16 %v1154
    %v1188 = vunpack.c.l.b16 %v1155
    %v1189 = vunpack.c.l.b16 %v1156
    %v1190 = vunpack.c.l.b16 %v1157
    %v1191 = vunpack.c.l.b16 %v1158
    %v1192 = vunpack.c.l.b16 %v1159
    %v1193 = vunpack.c.l.b16 %v1160
    %v1194 = vunpack.c.l.b16 %v1161
    %v1195 = vunpack.c.l.b16 %v1162
    %v1196 = vunpack.c.l.b16 %v1163
    %v1197 = vunpack.c.l.b16 %v1164
    %v1198 = vunpack.c.l.b16 %v1165
    %v1199 = vunpack.c.l.b16 %v1166
    %v1200 = vunpack.c.l.b16 %v1167
    %v1201 = vpack.c.b16 %v1186, %v1185
    %v1202 = vpack.c.b16 %v1188, %v1187
    %v1203 = vpack.c.b16 %v1190, %v1189
    %v1204 = vpack.c.b16 %v1192, %v1191
    %v1205 = vpack.c.b16 %v1194, %v1193
    %v1206 = vpack.c.b16 %v1196, %v1195
    %v1207 = vpack.c.b16 %v1198, %v1197
    %v1208 = vpack.c.b16 %v1200, %v1199
    %1217 = vmatpush.bf16.msra.mxu0 %v1208
    %1218 = vmatpush.bf16.msra.mxu0 %v1207
    %1219 = vmatpush.bf16.msra.mxu0 %v1206
    %1220 = vmatpush.bf16.msra.mxu0 %v1205
    %1221 = vmatpush.bf16.msra.mxu0 %v1204
    %1222 = vmatpush.bf16.msra.mxu0 %v1203
    %1223 = vmatpush.bf16.msra.mxu0 %v1202
    %1224 = vmatpush.bf16.msra.mxu0 %v1201
    %1225 = vmatmul.bf16.gmra.mxu0 %v1168
    %v1226 = vpop.f32.mrf.mxu0
    %v1227 = vadd.f32 0.0, %v1226
    %v1228 = vpop.f32.mrf.mxu0
    %1229 = vdwg.mxu0
    %v1230 = vadd.f32 %v1148, %v1227
    %s1231 = scalar_lea.vmem [#allocation4], 3
    %v1232 = vld [vmem:[%s1231] ss:$4 sm:$0x3]
    %s1233 = scalar_lea.vmem %s9, 192
    %v1234 = vld [vmem:[%s1233] sm:$0xf]
    %v1235 = vld [vmem:[%s1233 + $0x4] sm:$0xf]
    %v1236 = vld [vmem:[%s1233 + $0x8] sm:$0xf]
    %v1237 = vld [vmem:[%s1233 + $0xc] sm:$0xf]
    %v1238 = vld [vmem:[%s1233 + $0x10] sm:$0xf]
    %v1239 = vld [vmem:[%s1233 + $0x14] sm:$0xf]
    %v1240 = vld [vmem:[%s1233 + $0x18] sm:$0xf]
    %v1241 = vld [vmem:[%s1233 + $0x1c] sm:$0xf]
    %v1242 = vld [vmem:[%s1233 + $0x20] sm:$0xf]
    %v1243 = vld [vmem:[%s1233 + $0x24] sm:$0xf]
    %v1244 = vld [vmem:[%s1233 + $0x28] sm:$0xf]
    %v1245 = vld [vmem:[%s1233 + $0x2c] sm:$0xf]
    %v1246 = vld [vmem:[%s1233 + $0x30] sm:$0xf]
    %v1247 = vld [vmem:[%s1233 + $0x34] sm:$0xf]
    %v1248 = vld [vmem:[%s1233 + $0x38] sm:$0xf]
    %v1249 = vld [vmem:[%s1233 + $0x3c] sm:$0xf]
    %v1250 = vpack.c.bf16 %v1232, %v1232
    %v1267 = vunpack.c.l.b16 %v1234
    %v1268 = vunpack.c.l.b16 %v1235
    %v1269 = vunpack.c.l.b16 %v1236
    %v1270 = vunpack.c.l.b16 %v1237
    %v1271 = vunpack.c.l.b16 %v1238
    %v1272 = vunpack.c.l.b16 %v1239
    %v1273 = vunpack.c.l.b16 %v1240
    %v1274 = vunpack.c.l.b16 %v1241
    %v1275 = vunpack.c.l.b16 %v1242
    %v1276 = vunpack.c.l.b16 %v1243
    %v1277 = vunpack.c.l.b16 %v1244
    %v1278 = vunpack.c.l.b16 %v1245
    %v1279 = vunpack.c.l.b16 %v1246
    %v1280 = vunpack.c.l.b16 %v1247
    %v1281 = vunpack.c.l.b16 %v1248
    %v1282 = vunpack.c.l.b16 %v1249
    %v1283 = vpack.c.b16 %v1268, %v1267
    %v1284 = vpack.c.b16 %v1270, %v1269
    %v1285 = vpack.c.b16 %v1272, %v1271
    %v1286 = vpack.c.b16 %v1274, %v1273
    %v1287 = vpack.c.b16 %v1276, %v1275
    %v1288 = vpack.c.b16 %v1278, %v1277
    %v1289 = vpack.c.b16 %v1280, %v1279
    %v1290 = vpack.c.b16 %v1282, %v1281
    %1299 = vmatpush.bf16.msra.mxu0 %v1290
    %1300 = vmatpush.bf16.msra.mxu0 %v1289
    %1301 = vmatpush.bf16.msra.mxu0 %v1288
    %1302 = vmatpush.bf16.msra.mxu0 %v1287
    %1303 = vmatpush.bf16.msra.mxu0 %v1286
    %1304 = vmatpush.bf16.msra.mxu0 %v1285
    %1305 = vmatpush.bf16.msra.mxu0 %v1284
    %1306 = vmatpush.bf16.msra.mxu0 %v1283
    %1307 = vmatmul.bf16.gmra.mxu0 %v1250
    %v1308 = vpop.f32.mrf.mxu0
    %v1309 = vadd.f32 0.0, %v1308
    %v1310 = vpop.f32.mrf.mxu0
    %1311 = vdwg.mxu0
    %v1312 = vadd.f32 %v1230, %v1309
    %v1313 = vmax.f32 %v1312, 0.0
    %v1314 = vld [vmem:[%s11] sm:$0xf]
    %v1315 = vld [vmem:[%s11 + $0x4] sm:$0xf]
    %v1316 = vld [vmem:[%s11 + $0x8] sm:$0xf]
    %v1317 = vld [vmem:[%s11 + $0xc] sm:$0xf]
    %v1318 = vld [vmem:[%s11 + $0x10] sm:$0xf]
    %v1319 = vld [vmem:[%s11 + $0x14] sm:$0xf]
    %v1320 = vld [vmem:[%s11 + $0x18] sm:$0xf]
    %v1321 = vld [vmem:[%s11 + $0x1c] sm:$0xf]
    %v1322 = vpack.c.bf16 %v1313, %v1313
    %v1323 = vld [vmem:[%s12] sm:$0x1]
    %v1325 = vperm.slane %v1323, 0
    %v1335 = vunpack.c.l.b16 %v1314
    %v1336 = vunpack.c.l.b16 %v1315
    %v1337 = vunpack.c.l.b16 %v1316
    %v1338 = vunpack.c.l.b16 %v1317
    %v1339 = vunpack.c.l.b16 %v1318
    %v1340 = vunpack.c.l.b16 %v1319
    %v1341 = vunpack.c.l.b16 %v1320
    %v1342 = vunpack.c.l.b16 %v1321
    %v1343 = vpack.c.b16 %v1336, %v1335
    %v1344 = vpack.c.b16 %v1338, %v1337
    %v1345 = vpack.c.b16 %v1340, %v1339
    %v1346 = vpack.c.b16 %v1342, %v1341
    %v1352 = vsel %vm46, %v1322, 0
    %1354 = vmatpush.bf16.msra.mxu0 0
    %1355 = vmatpush.bf16.msra.mxu0 0
    %1356 = vmatpush.bf16.msra.mxu0 0
    %1357 = vmatpush.bf16.msra.mxu0 0
    %1358 = vmatpush.bf16.msra.mxu0 %v1346
    %1359 = vmatpush.bf16.msra.mxu0 %v1345
    %1360 = vmatpush.bf16.msra.mxu0 %v1344
    %1361 = vmatpush.bf16.msra.mxu0 %v1343
    %1362 = vmatmul.bf16.gmra.mxu0 %v1352
    %v1363 = vpop.f32.mrf.mxu0
    %v1364 = vadd.f32 %v1325, %v1363
    %v1365 = vpop.f32.mrf.mxu0
    %1366 = vdwg.mxu0
    %1367 = vst [vmem:[#allocation5] sm:$0x3] %v1364
    // Predicated region
    $region54: #{convnet5_forward.1} parent=1 // pred_check
      _
    $region55: #{convnet5_forward.1} parent=1 // pred_check_branch
      %1369 = sbr.rel (0) target = $region57
    $region56: #{convnet5_forward.1} parent=1 // pred_region
      %1371 = vsyncadd [#allocation6], 0
      %s1373 = sshll.u32 [#allocation5], 4
      %s1374 = int_to_ptr.vmem [resolvable:$true] %s1373
      %s1375 = sshll.u32 %s13, 4
      %s1376 = int_to_ptr.hbm [resolvable:$true] %s1375
      %1378 = dma.vmem_to_hbm [thread:$0]  %s1374, 32, %s1376, [#allocation6]
    $region57: #{convnet5_forward.1} parent=1 // pred_fallthru
      _
    // Predicated region
    $region58: #{convnet5_forward.1} parent=1 // pred_check
      _
    $region59: #{convnet5_forward.1} parent=1 // pred_check_branch
      %1380 = sbr.rel (0) target = $region61
    $region60: #{convnet5_forward.1} parent=1 // pred_region
      %1382 = dma.done [#allocation6], 32
    $region61: #{convnet5_forward.1} parent=1 // pred_fallthru
      _
    %1383 = vsyncpa [#allocation6], 1

</llo_original>
